<compile_context>
chip_gen: v7x
topology: tpu7x:2x2x1
jax: 0.10.0
libtpu: 0.0.40
codegen_flags: <defaults>
</compile_context>

<pallas_src>
import math

import jax
import jax.numpy as jnp
from jax import lax
from jax.experimental import pallas as pl
from jax.experimental.pallas import tpu as pltpu


# ----------------------------- in-kernel math helpers -----------------------------

def _gelu_tanh(x):
    # tanh-form GELU (EUP slot); |err| vs exact erf GELU < 5e-4, inside tolerance.
    c = math.sqrt(2.0 / math.pi)
    return 0.5 * x * (1.0 + jnp.tanh(c * (x + 0.044715 * x * x * x)))


def _sigmoid(x):
    # numerically-stable sigmoid via tanh (EUP).
    return 0.5 * (jnp.tanh(0.5 * x) + 1.0)


# ----------------------------- fused CDCA kernel -----------------------------------

def _make_cdca_kernel(H, W, C, Cr):
    HW = H * W

    def kernel(x_ref, wbig_ref, wca1_ref, mask_ref, o_ref):
        f32 = jnp.float32
        x = x_ref[0].astype(f32)                                   # (C, HW), lane-dense

        # ---- unpack packed weights (static slices, no runtime cost) ----------------
        o1 = C
        o2 = o1 + Cr
        o3 = o2 + 9
        o4 = o3 + 3
        o5 = o4 + 3
        wpw = wbig_ref[:, 0:o1]             # (C, C)  shared 1x1 conv weight (Cout, Cin)
        ca2w = wbig_ref[:, o1:o2]           # (C, Cr)
        w33 = wbig_ref[:, o2:o3]            # (C, 9)  taps t = (dy+1)*3 + (dx+1)
        w13 = wbig_ref[:, o3:o4]            # (C, 3)  dx = -1, 0, +1
        w31 = wbig_ref[:, o4:o5]            # (C, 3)  dy = -1, 0, +1
        bpw = wbig_ref[:, o5 + 0:o5 + 1]    # (C, 1) biases -----------------------
        ca2b = wbig_ref[:, o5 + 1:o5 + 2]
        b33 = wbig_ref[:, o5 + 2:o5 + 3]
        b13 = wbig_ref[:, o5 + 3:o5 + 4]
        b31 = wbig_ref[:, o5 + 4:o5 + 5]
        ca1w = wca1_ref[:, 0:C]             # (Cr, C)
        ca1b = wca1_ref[:, C:C + 1]         # (Cr, 1)

        # tap-validity masks (0/1 floats), precomputed in the wrapper.
        mwl = mask_ref[0:1, :]              # col >= 1       (dx = -1 valid)
        mwr = mask_ref[1:2, :]              # col <= W-2     (dx = +1 valid)
        mhu = mask_ref[2:3, :]              # p   >= W       (dy = -1 valid)
        mhd = mask_ref[3:4, :]              # p   <  HW-W    (dy = +1 valid)

        # ---- 1x1 conv + GELU --------------------------------------------------------
        y = _gelu_tanh(jnp.dot(wpw, x, preferred_element_type=f32) + bpw)

        # ---- channel attention (avg & max pools stacked -> one MLP evaluation) ------
        pooled = jnp.concatenate(
            [jnp.sum(y, axis=1, keepdims=True) * (1.0 / HW),       # adaptive_avg_pool2d
             jnp.max(y, axis=1, keepdims=True)],                   # adaptive_max_pool2d
            axis=1)                                                # (C, 2)
        h1 = jnp.maximum(jnp.dot(ca1w, pooled, preferred_element_type=f32) + ca1b, 0.0)
        s = _sigmoid(jnp.dot(ca2w, h1, preferred_element_type=f32) + ca2b)    # (C, 2)
        xatt = y * jnp.sum(s, axis=1, keepdims=True)               # sigmoid(avg)+sigmoid(max)

        # ---- depthwise convs: shared column shifts + aligned row shifts -------------
        def col_variants(z):                # dx = -1, 0, +1; w-mask applied once each
            zl = mwl * pltpu.roll(z, shift=1, axis=1)              # in[p-1]
            zr = mwr * pltpu.roll(z, shift=HW - 1, axis=1)         # in[p+1]
            return zl, z, zr

        def row_shift(t, dy):               # shift by dy rows + h-validity mask
            if dy == 0:
                return t
            t = pltpu.roll(t, shift=(-dy * W) % HW, axis=1)        # -> in[p + dy*W + dx]
            return t * (mhu if dy == -1 else mhd)

        # 3x3 depthwise
        cl, cc, cr_ = col_variants(xatt)
        x0 = jnp.zeros((C, HW), f32)
        for iy, dy in enumerate((-1, 0, 1)):
            for ix, col in enumerate((cl, cc, cr_)):
                t = iy * 3 + ix
                x0 = x0 + row_shift(col, dy) * w33[:, t:t + 1]
        x0 = x0 + b33

        # 1x3 depthwise (on x0)
        dl, dc, dr = col_variants(x0)
        xb = dl * w13[:, 0:1] + dc * w13[:, 1:2] + dr * w13[:, 2:3] + b13

        # 3x1 depthwise (on xb) + residual
        xc = (row_shift(xb, -1) * w31[:, 0:1] + xb * w31[:, 1:2]
              + row_shift(xb, 1) * w31[:, 2:3] + b31)
        xs = xc + x0

        # ---- spatial attention + output 1x1 convs ------------------------------------
        satt = jnp.dot(wpw, xs, preferred_element_type=f32) + bpw
        out = jnp.dot(wpw, satt * xatt, preferred_element_type=f32) + bpw
        o_ref[0] = out.astype(o_ref.dtype)                         # lane-dense store

    return kernel


# ----------------------------- jitted wrapper ---------------------------------------

@jax.jit
def cdca_forward_pallas(x_nchw, p):
    N, C, H, W = x_nchw.shape
    Cr = p["ca1_w"].shape[0]
    HW = H * W

    # ---- pack the 12 small weight/bias tensors into 2 operands ----------------------
    wpw = p["conv_w"][:, :, 0, 0]                                   # (Cout, Cin)
    ca2w = p["ca2_w"][:, :, 0, 0]                                   # (C, Cr)
    w33 = p["dw33_w"][:, 0].reshape(C, 9)                           # (C, 9)
    w13 = p["dw13_w"][:, 0, 0, :]                                   # (C, 3)
    w31 = p["dw31_w"][:, 0, :, 0]                                   # (C, 3)
    biases = jnp.stack([p["conv_b"], p["ca2_b"], p["dw33_b"],
                        p["dw13_b"], p["dw31_b"]], axis=1)           # (C, 5)
    wbig = jnp.concatenate([wpw, ca2w, w33, w13, w31, biases], axis=1)       # (C, 60)
    # ca1 is a 3x3 conv applied to a 1x1 (zero-padded) input -> only the centre tap acts.
    wca1 = jnp.concatenate([p["ca1_w"][:, :, 1, 1],
                            p["ca1_b"].reshape(Cr, 1)], axis=1)              # (Cr, C+1)

    # ---- depthwise-tap validity masks (computed here in plain XLA, not in-kernel) ---
    pos = jnp.arange(HW, dtype=jnp.int32)
    colw = pos % W
    masks = jnp.stack([colw >= 1, colw <= W - 2, pos >= W, pos < HW - W],
                      axis=0).astype(jnp.float32)                            # (4, HW)

    out = pl.pallas_call(
        _make_cdca_kernel(H, W, C, Cr),
        out_shape=jax.ShapeDtypeStruct((N, C, HW), x_nchw.dtype),
        grid=(N,),
        in_specs=[
            pl.BlockSpec((1, C, HW), lambda n: (n, 0, 0)),
            pl.BlockSpec(wbig.shape, lambda n: (0, 0)),
            pl.BlockSpec(wca1.shape, lambda n: (0, 0)),
            pl.BlockSpec(masks.shape, lambda n: (0, 0)),
        ],
        out_specs=pl.BlockSpec((1, C, HW), lambda n: (n, 0, 0)),
        # TODO(synk): on v7x use pltpu.CORE_PARALLEL for the batch axis (or an HW-split
        # grid axis with a +-W halo) so both TensorCores are used; add vmem_limit_bytes
        # + HW tiling before scaling H*W*C.
        compiler_params=pltpu.CompilerParams(dimension_semantics=("parallel",)),
    )(x_nchw.reshape(N, C, HW), wbig, wca1, masks)
    return out.reshape(N, C, H, W)


# ----------------------------- pure-JAX reference ------------------------------------

def _conv_ref(x, w_oihw, b, padding, groups=1):
    y = lax.conv_general_dilated(
        x, jnp.transpose(w_oihw, (2, 3, 1, 0)), window_strides=(1, 1), padding=padding,
        dimension_numbers=("NHWC", "HWIO", "NHWC"), feature_group_count=groups)
    return y + b.reshape(1, 1, 1, -1)


def cdca_forward_ref(x_nhwc, p):
    x = _conv_ref(x_nhwc, p["conv_w"], p["conv_b"], ((0, 0), (0, 0)))
    x = jax.nn.gelu(x, approximate=False)

    def ca_branch(v):
        h = _conv_ref(v, p["ca1_w"], p["ca1_b"], ((1, 1), (1, 1)))
        h = jax.nn.relu(h)
        h = _conv_ref(h, p["ca2_w"], p["ca2_b"], ((0, 0), (0, 0)))
        return jax.nn.sigmoid(h)

    avg = jnp.mean(x, axis=(1, 2), keepdims=True)
    mx = jnp.max(x, axis=(1, 2), keepdims=True)
    x = x * (ca_branch(avg) + ca_branch(mx))

    C = x.shape[-1]
    x0 = _conv_ref(x, p["dw33_w"], p["dw33_b"], ((1, 1), (1, 1)), groups=C)
    t = _conv_ref(x0, p["dw13_w"], p["dw13_b"], ((0, 0), (1, 1)), groups=C)
    t = _conv_ref(t, p["dw31_w"], p["dw31_b"], ((1, 1), (0, 0)), groups=C)
    xs = t + x0
    satt = _conv_ref(xs, p["conv_w"], p["conv_b"], ((0, 0), (0, 0)))
    out = satt * x
    return _conv_ref(out, p["conv_w"], p["conv_b"], ((0, 0), (0, 0)))


# ----------------------------- main ----------------------------------------------------

if __name__ == "__main__":
    N, C, H, W = 2, 32, 16, 16
    reduction = 4
    Cr = C // reduction

    key = jax.random.PRNGKey(0)
    ks = jax.random.split(key, 13)

    def init(k, shape, scale=0.1):
        return (scale * jax.random.normal(k, shape)).astype(jnp.float32)

    params = dict(
        conv_w=init(ks[0], (C, C, 1, 1)), conv_b=init(ks[1], (C,)),
        ca1_w=init(ks[2], (Cr, C, 3, 3)), ca1_b=init(ks[3], (Cr,)),
        ca2_w=init(ks[4], (C, Cr, 1, 1)), ca2_b=init(ks[5], (C,)),
        dw33_w=init(ks[6], (C, 1, 3, 3)), dw33_b=init(ks[7], (C,)),
        dw13_w=init(ks[8], (C, 1, 1, 3)), dw13_b=init(ks[9], (C,)),
        dw31_w=init(ks[10], (C, 1, 3, 1)), dw31_b=init(ks[11], (C,)),
    )

    x_nchw = jax.random.normal(ks[12], (N, C, H, W), jnp.float32)   # PyTorch-style input

    out = jax.block_until_ready(cdca_forward_pallas(x_nchw, params))        # (N, C, H, W)
    ref = jnp.transpose(
        cdca_forward_ref(jnp.transpose(x_nchw, (0, 2, 3, 1)), params), (0, 3, 1, 2))
    ref = jax.block_until_ready(ref)

    err = float(jnp.max(jnp.abs(out - ref)))
    assert err < 1e-2, f"max abs err {err}"
    print("KERNEL_OK")
</pallas_src>

<mosaic_0001>
module attributes {stable_mosaic.version = 11 : i64} {
  func.func @kernel(%arg0: i32, %arg1: memref<1x32x256xf32, #tpu.memory_space<vmem>>, %arg2: memref<32x60xf32, #tpu.memory_space<vmem>>, %arg3: memref<8x33xf32, #tpu.memory_space<vmem>>, %arg4: memref<4x256xf32, #tpu.memory_space<vmem>>, %arg5: memref<1x32x256xf32, #tpu.memory_space<vmem>>) attributes {dimension_semantics = [#tpu.dimension_semantics<parallel>], iteration_bounds = array<i64: 2>, scalar_prefetch = 0 : i64, scratch_operands = 0 : i64, tpu.core_type = #tpu.core_type<tc>, window_params = [{transform_indices = @transform_0, window_bounds = array<i64: 1, 32, 256>}, {pipeline_mode = #tpu.pipeline_mode<synchronous>, transform_indices = @transform_1, window_bounds = array<i64: 32, 60>}, {pipeline_mode = #tpu.pipeline_mode<synchronous>, transform_indices = @transform_2, window_bounds = array<i64: 8, 33>}, {pipeline_mode = #tpu.pipeline_mode<synchronous>, transform_indices = @transform_3, window_bounds = array<i64: 4, 256>}, {transform_indices = @transform_4, window_bounds = array<i64: 1, 32, 256>}]} {
    %c0 = arith.constant 0 : index
    %c0_0 = arith.constant 0 : index
    %c0_1 = arith.constant 0 : index
    %0 = vector.load %arg1[%c0, %c0_0, %c0_1] : memref<1x32x256xf32, #tpu.memory_space<vmem>>, vector<1x32x256xf32>
    %1 = vector.shape_cast %0 : vector<1x32x256xf32> to vector<32x256xf32>
    %c0_2 = arith.constant 0 : index
    %c0_3 = arith.constant 0 : index
    %2 = vector.load %arg2[%c0_2, %c0_3] : memref<32x60xf32, #tpu.memory_space<vmem>>, vector<32x32xf32>
    %c0_4 = arith.constant 0 : index
    %c32 = arith.constant 32 : index
    %3 = vector.load %arg2[%c0_4, %c32] : memref<32x60xf32, #tpu.memory_space<vmem>>, vector<32x8xf32>
    %c0_5 = arith.constant 0 : index
    %c40 = arith.constant 40 : index
    %4 = vector.load %arg2[%c0_5, %c40] : memref<32x60xf32, #tpu.memory_space<vmem>>, vector<32x9xf32>
    %c0_6 = arith.constant 0 : index
    %c49 = arith.constant 49 : index
    %5 = vector.load %arg2[%c0_6, %c49] : memref<32x60xf32, #tpu.memory_space<vmem>>, vector<32x3xf32>
    %c0_7 = arith.constant 0 : index
    %c52 = arith.constant 52 : index
    %6 = vector.load %arg2[%c0_7, %c52] : memref<32x60xf32, #tpu.memory_space<vmem>>, vector<32x3xf32>
    %c0_8 = arith.constant 0 : index
    %c55 = arith.constant 55 : index
    %7 = vector.load %arg2[%c0_8, %c55] : memref<32x60xf32, #tpu.memory_space<vmem>>, vector<32x1xf32>
    %c0_9 = arith.constant 0 : index
    %c56 = arith.constant 56 : index
    %8 = vector.load %arg2[%c0_9, %c56] : memref<32x60xf32, #tpu.memory_space<vmem>>, vector<32x1xf32>
    %c0_10 = arith.constant 0 : index
    %c57 = arith.constant 57 : index
    %9 = vector.load %arg2[%c0_10, %c57] : memref<32x60xf32, #tpu.memory_space<vmem>>, vector<32x1xf32>
    %c0_11 = arith.constant 0 : index
    %c58 = arith.constant 58 : index
    %10 = vector.load %arg2[%c0_11, %c58] : memref<32x60xf32, #tpu.memory_space<vmem>>, vector<32x1xf32>
    %c0_12 = arith.constant 0 : index
    %c59 = arith.constant 59 : index
    %11 = vector.load %arg2[%c0_12, %c59] : memref<32x60xf32, #tpu.memory_space<vmem>>, vector<32x1xf32>
    %c0_13 = arith.constant 0 : index
    %c0_14 = arith.constant 0 : index
    %12 = vector.load %arg3[%c0_13, %c0_14] : memref<8x33xf32, #tpu.memory_space<vmem>>, vector<8x32xf32>
    %c0_15 = arith.constant 0 : index
    %c32_16 = arith.constant 32 : index
    %13 = vector.load %arg3[%c0_15, %c32_16] : memref<8x33xf32, #tpu.memory_space<vmem>>, vector<8x1xf32>
    %c0_17 = arith.constant 0 : index
    %c0_18 = arith.constant 0 : index
    %14 = vector.load %arg4[%c0_17, %c0_18] : memref<4x256xf32, #tpu.memory_space<vmem>>, vector<1x256xf32>
    %c1 = arith.constant 1 : index
    %c0_19 = arith.constant 0 : index
    %15 = vector.load %arg4[%c1, %c0_19] : memref<4x256xf32, #tpu.memory_space<vmem>>, vector<1x256xf32>
    %c2 = arith.constant 2 : index
    %c0_20 = arith.constant 0 : index
    %16 = vector.load %arg4[%c2, %c0_20] : memref<4x256xf32, #tpu.memory_space<vmem>>, vector<1x256xf32>
    %c3 = arith.constant 3 : index
    %c0_21 = arith.constant 0 : index
    %17 = vector.load %arg4[%c3, %c0_21] : memref<4x256xf32, #tpu.memory_space<vmem>>, vector<1x256xf32>
    %cst = arith.constant dense<0.000000e+00> : vector<32x256xf32>
    %18 = tpu.matmul %2, %1, %cst {dimension_numbers = #tpu.dot_dimension_numbers<[1], [0], [0], [1], [0, 0, 1, 1], [], []>} : vector<32x32xf32>, vector<32x256xf32>, vector<32x256xf32> -> vector<32x256xf32>
    %19 = vector.broadcast %7 : vector<32x1xf32> to vector<32x256xf32>
    %20 = arith.addf %18, %19 : vector<32x256xf32>
    %cst_22 = arith.constant 5.000000e-01 : f32
    %21 = vector.broadcast %cst_22 : f32 to vector<32x256xf32>
    %22 = arith.mulf %21, %20 : vector<32x256xf32>
    %cst_23 = arith.constant 4.471500e-02 : f32
    %23 = vector.broadcast %cst_23 : f32 to vector<32x256xf32>
    %24 = arith.mulf %23, %20 : vector<32x256xf32>
    %25 = arith.mulf %24, %20 : vector<32x256xf32>
    %26 = arith.mulf %25, %20 : vector<32x256xf32>
    %27 = arith.addf %20, %26 : vector<32x256xf32>
    %cst_24 = arith.constant 0.797884583 : f32
    %28 = vector.broadcast %cst_24 : f32 to vector<32x256xf32>
    %29 = arith.mulf %28, %27 : vector<32x256xf32>
    %30 = math.tanh %29 : vector<32x256xf32>
    %cst_25 = arith.constant 1.000000e+00 : f32
    %31 = vector.broadcast %cst_25 : f32 to vector<32x256xf32>
    %32 = arith.addf %31, %30 : vector<32x256xf32>
    %33 = arith.mulf %22, %32 : vector<32x256xf32>
    %cst_26 = arith.constant dense<0.000000e+00> : vector<32xf32>
    %34 = vector.multi_reduction <add>, %33, %cst_26 [1] : vector<32x256xf32> to vector<32xf32>
    %35 = vector.shape_cast %34 : vector<32xf32> to vector<32x1xf32>
    %cst_27 = arith.constant 3.906250e-03 : f32
    %36 = vector.broadcast %cst_27 : f32 to vector<32x1xf32>
    %37 = arith.mulf %35, %36 : vector<32x1xf32>
    %cst_28 = arith.constant dense<0xFF800000> : vector<32xf32>
    %38 = vector.multi_reduction <maximumf>, %33, %cst_28 [1] : vector<32x256xf32> to vector<32xf32>
    %39 = vector.shape_cast %38 : vector<32xf32> to vector<32x1xf32>
    %40 = tpu.concatenate %37, %39 in 1 : vector<32x1xf32>, vector<32x1xf32> -> vector<32x2xf32>
    %cst_29 = arith.constant dense<0.000000e+00> : vector<8x2xf32>
    %41 = tpu.matmul %12, %40, %cst_29 {dimension_numbers = #tpu.dot_dimension_numbers<[1], [0], [0], [1], [0, 0, 1, 1], [], []>} : vector<8x32xf32>, vector<32x2xf32>, vector<8x2xf32> -> vector<8x2xf32>
    %42 = vector.broadcast %13 : vector<8x1xf32> to vector<8x2xf32>
    %43 = arith.addf %41, %42 : vector<8x2xf32>
    %cst_30 = arith.constant 0.000000e+00 : f32
    %44 = vector.broadcast %cst_30 : f32 to vector<8x2xf32>
    %45 = arith.maximumf %43, %44 : vector<8x2xf32>
    %cst_31 = arith.constant dense<0.000000e+00> : vector<32x2xf32>
    %46 = tpu.matmul %3, %45, %cst_31 {dimension_numbers = #tpu.dot_dimension_numbers<[1], [0], [0], [1], [0, 0, 1, 1], [], []>} : vector<32x8xf32>, vector<8x2xf32>, vector<32x2xf32> -> vector<32x2xf32>
    %47 = vector.broadcast %8 : vector<32x1xf32> to vector<32x2xf32>
    %48 = arith.addf %46, %47 : vector<32x2xf32>
    %cst_32 = arith.constant 5.000000e-01 : f32
    %49 = vector.broadcast %cst_32 : f32 to vector<32x2xf32>
    %50 = arith.mulf %49, %48 : vector<32x2xf32>
    %51 = math.tanh %50 : vector<32x2xf32>
    %cst_33 = arith.constant 1.000000e+00 : f32
    %52 = vector.broadcast %cst_33 : f32 to vector<32x2xf32>
    %53 = arith.addf %51, %52 : vector<32x2xf32>
    %cst_34 = arith.constant 5.000000e-01 : f32
    %54 = vector.broadcast %cst_34 : f32 to vector<32x2xf32>
    %55 = arith.mulf %54, %53 : vector<32x2xf32>
    %cst_35 = arith.constant dense<0.000000e+00> : vector<32xf32>
    %56 = vector.multi_reduction <add>, %55, %cst_35 [1] : vector<32x2xf32> to vector<32xf32>
    %57 = vector.shape_cast %56 : vector<32xf32> to vector<32x1xf32>
    %58 = vector.broadcast %57 : vector<32x1xf32> to vector<32x256xf32>
    %59 = arith.mulf %33, %58 : vector<32x256xf32>
    %c1_i32 = arith.constant 1 : i32
    %60 = tpu.dynamic_rotate %59 by %c1_i32 dim 1 : vector<32x256xf32>, i32 -> vector<32x256xf32>
    %61 = vector.broadcast %14 : vector<1x256xf32> to vector<32x256xf32>
    %62 = arith.mulf %61, %60 : vector<32x256xf32>
    %c255_i32 = arith.constant 255 : i32
    %63 = tpu.dynamic_rotate %59 by %c255_i32 dim 1 : vector<32x256xf32>, i32 -> vector<32x256xf32>
    %64 = vector.broadcast %15 : vector<1x256xf32> to vector<32x256xf32>
    %65 = arith.mulf %64, %63 : vector<32x256xf32>
    %cst_36 = arith.constant 0.000000e+00 : f32
    %66 = vector.broadcast %cst_36 : f32 to vector<32x256xf32>
    %c16_i32 = arith.constant 16 : i32
    %67 = tpu.dynamic_rotate %62 by %c16_i32 dim 1 : vector<32x256xf32>, i32 -> vector<32x256xf32>
    %68 = vector.broadcast %16 : vector<1x256xf32> to vector<32x256xf32>
    %69 = arith.mulf %67, %68 : vector<32x256xf32>
    %70 = vector.extract_strided_slice %4 {offsets = [0, 0], sizes = [32, 1], strides = [1, 1]} : vector<32x9xf32> to vector<32x1xf32>
    %71 = vector.broadcast %70 : vector<32x1xf32> to vector<32x256xf32>
    %72 = arith.mulf %69, %71 : vector<32x256xf32>
    %73 = arith.addf %66, %72 : vector<32x256xf32>
    %c16_i32_37 = arith.constant 16 : i32
    %74 = tpu.dynamic_rotate %59 by %c16_i32_37 dim 1 : vector<32x256xf32>, i32 -> vector<32x256xf32>
    %75 = vector.broadcast %16 : vector<1x256xf32> to vector<32x256xf32>
    %76 = arith.mulf %74, %75 : vector<32x256xf32>
    %77 = vector.extract_strided_slice %4 {offsets = [0, 1], sizes = [32, 1], strides = [1, 1]} : vector<32x9xf32> to vector<32x1xf32>
    %78 = vector.broadcast %77 : vector<32x1xf32> to vector<32x256xf32>
    %79 = arith.mulf %76, %78 : vector<32x256xf32>
    %80 = arith.addf %73, %79 : vector<32x256xf32>
    %c16_i32_38 = arith.constant 16 : i32
    %81 = tpu.dynamic_rotate %65 by %c16_i32_38 dim 1 : vector<32x256xf32>, i32 -> vector<32x256xf32>
    %82 = vector.broadcast %16 : vector<1x256xf32> to vector<32x256xf32>
    %83 = arith.mulf %81, %82 : vector<32x256xf32>
    %84 = vector.extract_strided_slice %4 {offsets = [0, 2], sizes = [32, 1], strides = [1, 1]} : vector<32x9xf32> to vector<32x1xf32>
    %85 = vector.broadcast %84 : vector<32x1xf32> to vector<32x256xf32>
    %86 = arith.mulf %83, %85 : vector<32x256xf32>
    %87 = arith.addf %80, %86 : vector<32x256xf32>
    %88 = vector.extract_strided_slice %4 {offsets = [0, 3], sizes = [32, 1], strides = [1, 1]} : vector<32x9xf32> to vector<32x1xf32>
    %89 = vector.broadcast %88 : vector<32x1xf32> to vector<32x256xf32>
    %90 = arith.mulf %62, %89 : vector<32x256xf32>
    %91 = arith.addf %87, %90 : vector<32x256xf32>
    %92 = vector.extract_strided_slice %4 {offsets = [0, 4], sizes = [32, 1], strides = [1, 1]} : vector<32x9xf32> to vector<32x1xf32>
    %93 = vector.broadcast %92 : vector<32x1xf32> to vector<32x256xf32>
    %94 = arith.mulf %59, %93 : vector<32x256xf32>
    %95 = arith.addf %91, %94 : vector<32x256xf32>
    %96 = vector.extract_strided_slice %4 {offsets = [0, 5], sizes = [32, 1], strides = [1, 1]} : vector<32x9xf32> to vector<32x1xf32>
    %97 = vector.broadcast %96 : vector<32x1xf32> to vector<32x256xf32>
    %98 = arith.mulf %65, %97 : vector<32x256xf32>
    %99 = arith.addf %95, %98 : vector<32x256xf32>
    %c240_i32 = arith.constant 240 : i32
    %100 = tpu.dynamic_rotate %62 by %c240_i32 dim 1 : vector<32x256xf32>, i32 -> vector<32x256xf32>
    %101 = vector.broadcast %17 : vector<1x256xf32> to vector<32x256xf32>
    %102 = arith.mulf %100, %101 : vector<32x256xf32>
    %103 = vector.extract_strided_slice %4 {offsets = [0, 6], sizes = [32, 1], strides = [1, 1]} : vector<32x9xf32> to vector<32x1xf32>
    %104 = vector.broadcast %103 : vector<32x1xf32> to vector<32x256xf32>
    %105 = arith.mulf %102, %104 : vector<32x256xf32>
    %106 = arith.addf %99, %105 : vector<32x256xf32>
    %c240_i32_39 = arith.constant 240 : i32
    %107 = tpu.dynamic_rotate %59 by %c240_i32_39 dim 1 : vector<32x256xf32>, i32 -> vector<32x256xf32>
    %108 = vector.broadcast %17 : vector<1x256xf32> to vector<32x256xf32>
    %109 = arith.mulf %107, %108 : vector<32x256xf32>
    %110 = vector.extract_strided_slice %4 {offsets = [0, 7], sizes = [32, 1], strides = [1, 1]} : vector<32x9xf32> to vector<32x1xf32>
    %111 = vector.broadcast %110 : vector<32x1xf32> to vector<32x256xf32>
    %112 = arith.mulf %109, %111 : vector<32x256xf32>
    %113 = arith.addf %106, %112 : vector<32x256xf32>
    %c240_i32_40 = arith.constant 240 : i32
    %114 = tpu.dynamic_rotate %65 by %c240_i32_40 dim 1 : vector<32x256xf32>, i32 -> vector<32x256xf32>
    %115 = vector.broadcast %17 : vector<1x256xf32> to vector<32x256xf32>
    %116 = arith.mulf %114, %115 : vector<32x256xf32>
    %117 = vector.extract_strided_slice %4 {offsets = [0, 8], sizes = [32, 1], strides = [1, 1]} : vector<32x9xf32> to vector<32x1xf32>
    %118 = vector.broadcast %117 : vector<32x1xf32> to vector<32x256xf32>
    %119 = arith.mulf %116, %118 : vector<32x256xf32>
    %120 = arith.addf %113, %119 : vector<32x256xf32>
    %121 = vector.broadcast %9 : vector<32x1xf32> to vector<32x256xf32>
    %122 = arith.addf %120, %121 : vector<32x256xf32>
    %c1_i32_41 = arith.constant 1 : i32
    %123 = tpu.dynamic_rotate %122 by %c1_i32_41 dim 1 : vector<32x256xf32>, i32 -> vector<32x256xf32>
    %124 = vector.broadcast %14 : vector<1x256xf32> to vector<32x256xf32>
    %125 = arith.mulf %124, %123 : vector<32x256xf32>
    %c255_i32_42 = arith.constant 255 : i32
    %126 = tpu.dynamic_rotate %122 by %c255_i32_42 dim 1 : vector<32x256xf32>, i32 -> vector<32x256xf32>
    %127 = vector.broadcast %15 : vector<1x256xf32> to vector<32x256xf32>
    %128 = arith.mulf %127, %126 : vector<32x256xf32>
    %129 = vector.extract_strided_slice %5 {offsets = [0, 0], sizes = [32, 1], strides = [1, 1]} : vector<32x3xf32> to vector<32x1xf32>
    %130 = vector.broadcast %129 : vector<32x1xf32> to vector<32x256xf32>
    %131 = arith.mulf %125, %130 : vector<32x256xf32>
    %132 = vector.extract_strided_slice %5 {offsets = [0, 1], sizes = [32, 1], strides = [1, 1]} : vector<32x3xf32> to vector<32x1xf32>
    %133 = vector.broadcast %132 : vector<32x1xf32> to vector<32x256xf32>
    %134 = arith.mulf %122, %133 : vector<32x256xf32>
    %135 = arith.addf %131, %134 : vector<32x256xf32>
    %136 = vector.extract_strided_slice %5 {offsets = [0, 2], sizes = [32, 1], strides = [1, 1]} : vector<32x3xf32> to vector<32x1xf32>
    %137 = vector.broadcast %136 : vector<32x1xf32> to vector<32x256xf32>
    %138 = arith.mulf %128, %137 : vector<32x256xf32>
    %139 = arith.addf %135, %138 : vector<32x256xf32>
    %140 = vector.broadcast %10 : vector<32x1xf32> to vector<32x256xf32>
    %141 = arith.addf %139, %140 : vector<32x256xf32>
    %c16_i32_43 = arith.constant 16 : i32
    %142 = tpu.dynamic_rotate %141 by %c16_i32_43 dim 1 : vector<32x256xf32>, i32 -> vector<32x256xf32>
    %143 = vector.broadcast %16 : vector<1x256xf32> to vector<32x256xf32>
    %144 = arith.mulf %142, %143 : vector<32x256xf32>
    %145 = vector.extract_strided_slice %6 {offsets = [0, 0], sizes = [32, 1], strides = [1, 1]} : vector<32x3xf32> to vector<32x1xf32>
    %146 = vector.broadcast %145 : vector<32x1xf32> to vector<32x256xf32>
    %147 = arith.mulf %144, %146 : vector<32x256xf32>
    %148 = vector.extract_strided_slice %6 {offsets = [0, 1], sizes = [32, 1], strides = [1, 1]} : vector<32x3xf32> to vector<32x1xf32>
    %149 = vector.broadcast %148 : vector<32x1xf32> to vector<32x256xf32>
    %150 = arith.mulf %141, %149 : vector<32x256xf32>
    %151 = arith.addf %147, %150 : vector<32x256xf32>
    %c240_i32_44 = arith.constant 240 : i32
    %152 = tpu.dynamic_rotate %141 by %c240_i32_44 dim 1 : vector<32x256xf32>, i32 -> vector<32x256xf32>
    %153 = vector.broadcast %17 : vector<1x256xf32> to vector<32x256xf32>
    %154 = arith.mulf %152, %153 : vector<32x256xf32>
    %155 = vector.extract_strided_slice %6 {offsets = [0, 2], sizes = [32, 1], strides = [1, 1]} : vector<32x3xf32> to vector<32x1xf32>
    %156 = vector.broadcast %155 : vector<32x1xf32> to vector<32x256xf32>
    %157 = arith.mulf %154, %156 : vector<32x256xf32>
    %158 = arith.addf %151, %157 : vector<32x256xf32>
    %159 = vector.broadcast %11 : vector<32x1xf32> to vector<32x256xf32>
    %160 = arith.addf %158, %159 : vector<32x256xf32>
    %161 = arith.addf %160, %122 : vector<32x256xf32>
    %cst_45 = arith.constant dense<0.000000e+00> : vector<32x256xf32>
    %162 = tpu.matmul %2, %161, %cst_45 {dimension_numbers = #tpu.dot_dimension_numbers<[1], [0], [0], [1], [0, 0, 1, 1], [], []>} : vector<32x32xf32>, vector<32x256xf32>, vector<32x256xf32> -> vector<32x256xf32>
    %163 = vector.broadcast %7 : vector<32x1xf32> to vector<32x256xf32>
    %164 = arith.addf %162, %163 : vector<32x256xf32>
    %165 = arith.mulf %164, %59 : vector<32x256xf32>
    %cst_46 = arith.constant dense<0.000000e+00> : vector<32x256xf32>
    %166 = tpu.matmul %2, %165, %cst_46 {dimension_numbers = #tpu.dot_dimension_numbers<[1], [0], [0], [1], [0, 0, 1, 1], [], []>} : vector<32x32xf32>, vector<32x256xf32>, vector<32x256xf32> -> vector<32x256xf32>
    %167 = vector.broadcast %7 : vector<32x1xf32> to vector<32x256xf32>
    %168 = arith.addf %166, %167 : vector<32x256xf32>
    %c0_47 = arith.constant 0 : index
    %c0_48 = arith.constant 0 : index
    %c0_49 = arith.constant 0 : index
    %169 = vector.load %arg5[%c0_47, %c0_48, %c0_49] : memref<1x32x256xf32, #tpu.memory_space<vmem>>, vector<1x32x256xf32>
    %170 = vector.shape_cast %169 : vector<1x32x256xf32> to vector<32x256xf32>
    %171 = vector.shape_cast %168 : vector<32x256xf32> to vector<1x32x256xf32>
    tpu.vector_store %arg5[%c0_47, %c0_48, %c0_49], %171 {strides = array<i32>} : memref<1x32x256xf32, #tpu.memory_space<vmem>>, vector<1x32x256xf32>,
    return
  }
  func.func @transform_0(%arg0: i32) -> (i32, i32, i32) {
    %c0_i32 = arith.constant 0 : i32
    %c0_i32_0 = arith.constant 0 : i32
    %c0_i32_1 = arith.constant 0 : i32
    return %arg0, %c0_i32, %c0_i32_0 : i32, i32, i32
  }
  func.func @transform_1(%arg0: i32) -> (i32, i32) {
    %c0_i32 = arith.constant 0 : i32
    %c0_i32_0 = arith.constant 0 : i32
    %c0_i32_1 = arith.constant 0 : i32
    return %c0_i32, %c0_i32_0 : i32, i32
  }
  func.func @transform_2(%arg0: i32) -> (i32, i32) {
    %c0_i32 = arith.constant 0 : i32
    %c0_i32_0 = arith.constant 0 : i32
    %c0_i32_1 = arith.constant 0 : i32
    return %c0_i32, %c0_i32_0 : i32, i32
  }
  func.func @transform_3(%arg0: i32) -> (i32, i32) {
    %c0_i32 = arith.constant 0 : i32
    %c0_i32_0 = arith.constant 0 : i32
    %c0_i32_1 = arith.constant 0 : i32
    return %c0_i32, %c0_i32_0 : i32, i32
  }
  func.func @transform_4(%arg0: i32) -> (i32, i32, i32) {
    %c0_i32 = arith.constant 0 : i32
    %c0_i32_0 = arith.constant 0 : i32
    %c0_i32_1 = arith.constant 0 : i32
    return %arg0, %c0_i32, %c0_i32_0 : i32, i32, i32
  }
}

</mosaic_0001>

<llo_original>
// kernel: squeeze.8
$region0: #{squeeze.8}
  %s0 = inlined_call_operand.vmem [shape: f32[32,3,3], index: 0, kind: input, shape index: {}]
  %s1 = inlined_call_operand.vmem [shape: f32[32,9], index: 1, kind: output, shape index: {}]
  $region1: #{squeeze.8} parent=0
    #allocation0 [shape = 'u8[12288]{0}', space=vmem, size = 0x3000, scoped, tag = 'scoped mem for input reshape']
    %s3 = sshllo.u32 0, 4
    %s4 = smul.addr 4, 2
    %s5 = scalar_lea.vmem %s0, %s4
    %v6 = vld [vmem:[%s5] sm:%s3]
    %s7 = scalar_lea.vmem [#allocation0], 16
    %8 = vst [vmem:[%s7] sm:%s3] %v6
    %s9 = scalar_lea.vmem %s0, 4
    %v10 = vld [vmem:[%s9] sm:%s3]
    %s11 = scalar_lea.vmem [#allocation0], 8
    %12 = vst [vmem:[%s11] sm:%s3] %v10
    %v13 = vld [vmem:[%s0] sm:%s3]
    %14 = vst [vmem:[#allocation0] sm:%s3] %v13
    %v15 = vld [vmem:[#allocation0] sm:$0x7]
    %vm16 = vcmask 261120
    %17 = vst.msk [vmem:[%s1] sm:$0x7] %vm16, %v15
    %s18 = scalar_lea.vmem [#allocation0], 8
    %v19 = vld [vmem:[%s18] sm:$0x7]
    %vm20 = vcmask 261120
    %s21 = scalar_lea.vmem %s1, 3
    %22 = vst.msk [vmem:[%s21] sm:$0x7] %vm20, %v19
    %s23 = scalar_lea.vmem [#allocation0], 16
    %v24 = vld [vmem:[%s23] sm:$0x7]
    %vm25 = vcmask 261120
    %s26 = scalar_lea.vmem %s1, 6
    %27 = vst.msk [vmem:[%s26] sm:$0x7] %vm25, %v24

// kernel: cdca_forward_pallas.1
$region0: #{cdca_forward_pallas.1}
  #allocation0 [shape = 'u32[]', space=smem, size = 0x4, offset = 0x4, fixed_abs, tag = 'smem constant byte address 0x4 - core index']
  #allocation1 [shape = 'u32[144,128]{1,0:T(1,128)}', space=vmem, size = 0x12000, scoped, tag = 'internal scratch']
  %s0 = inlined_call_operand.vmem [shape: f32[2,32,256], index: 0, kind: input, shape index: {}]
  %s1 = inlined_call_operand.vmem [shape: f32[32,60], index: 1, kind: input, shape index: {}]
  %s2 = inlined_call_operand.vmem [shape: f32[8,33], index: 2, kind: input, shape index: {}]
  %s3 = inlined_call_operand.vmem [shape: f32[4,256], index: 3, kind: input, shape index: {}]
  %s4 = inlined_call_operand.vmem [shape: f32[2,32,256], index: 4, kind: output, shape index: {}]
  %s5 = sld [smem:[#allocation0]]
  $region49: #{cdca_forward_pallas.1} parent=0
    _
  %s7 = ssub.s32 1, %s5
  %s8 = scalar_select 0, %s7, %s5
  loop: start=0, step=1, limit=4
  $region2: #{cdca_forward_pallas.1} parent=0 // loop_pre_header
    _
  $region3: #{cdca_forward_pallas.1} parent=0 // loop_header
    %s10 = sphi 0, %s14
    %p11 = scmp.ge.s32.totalorder %s10, 4
    %s20 = sphi 0, %s22
    %s23 = sphi 0, %s20
    %s24 = sphi 0, %s23
    %s40 = sphi 0, %s24
    %s44 = sphi 0, %s44
    %s46 = sphi 0, %s44
    %s47 = sphi 0, %s46
    %s61 = sphi 0, %s47
    %s65 = sphi 0, %s65
    %s67 = sphi 0, %s65
    %s68 = sphi 0, %s67
    %s82 = sphi 0, %s68
    %s86 = sphi 0, %s86
    %s88 = sphi 0, %s86
    %s89 = sphi 0, %s88
    %s103 = sphi 0, %s89
    %s109 = sphi 0, %s111
    %s112 = sphi 0, %s109
    %s113 = sphi 0, %s112
    %s129 = sphi 0, %s113
  $region4: #{cdca_forward_pallas.1} parent=0 // loop_header_branch
    %13 = sbr.rel (%p11) target = $region8
  $region5: #{cdca_forward_pallas.1} parent=0 // loop_body
    %s15 = ssub.s32 %s10, 1
    %s16 = ssub.s32 %s10, 2
    %s17 = sadd.s32 %s10, 1
    %s18 = ssub.s32 %s10, %s17
    %p19 = scmp.eq.s32.totalorder %s18, 0
    %s21 = sadd.s32 %s20, 1
    %s22 = scalar_select %p19, %s20, %s21
    %p25 = pneg %p19
    %p26 = scmp.eq.s32.totalorder %s10, 1
    %p27 = por %p25, %p26
    %p28 = scmp.ne.s32.totalorder %s20, %s23
    %p29 = scmp.eq.s32.totalorder %s10, 0
    %p30 = por %p28, %p29
    %p31 = scmp.ne.s32.totalorder %s20, %s23
    %p32 = scmp.eq.s32.totalorder %s15, 1
    %p33 = por %p31, %p32
    %p34 = scmp.ne.s32.totalorder %s23, %s24
    %p35 = scmp.eq.s32.totalorder %s15, 0
    %p36 = por %p34, %p35
    %p37 = scmp.ne.s32.totalorder %s23, %s24
    %p38 = scmp.eq.s32.totalorder %s16, 1
    %p39 = por %p37, %p38
    %p41 = scmp.ne.s32.totalorder %s24, %s40
    %p42 = scmp.eq.s32.totalorder %s16, 0
    %p43 = por %p41, %p42
    %s45 = sadd.s32 %s44, 1
    %p48 = scmp.eq.s32.totalorder %s10, 1
    %p49 = scmp.ne.s32.totalorder %s44, %s46
    %p50 = scmp.eq.s32.totalorder %s10, 0
    %p51 = por %p49, %p50
    %p52 = scmp.ne.s32.totalorder %s44, %s46
    %p53 = scmp.eq.s32.totalorder %s15, 1
    %p54 = por %p52, %p53
    %p55 = scmp.ne.s32.totalorder %s46, %s47
    %p56 = scmp.eq.s32.totalorder %s15, 0
    %p57 = por %p55, %p56
    %p58 = scmp.ne.s32.totalorder %s46, %s47
    %p59 = scmp.eq.s32.totalorder %s16, 1
    %p60 = por %p58, %p59
    %p62 = scmp.ne.s32.totalorder %s47, %s61
    %p63 = scmp.eq.s32.totalorder %s16, 0
    %p64 = por %p62, %p63
    %s66 = sadd.s32 %s65, 1
    %p69 = scmp.eq.s32.totalorder %s10, 1
    %p70 = scmp.ne.s32.totalorder %s65, %s67
    %p71 = scmp.eq.s32.totalorder %s10, 0
    %p72 = por %p70, %p71
    %p73 = scmp.ne.s32.totalorder %s65, %s67
    %p74 = scmp.eq.s32.totalorder %s15, 1
    %p75 = por %p73, %p74
    %p76 = scmp.ne.s32.totalorder %s67, %s68
    %p77 = scmp.eq.s32.totalorder %s15, 0
    %p78 = por %p76, %p77
    %p79 = scmp.ne.s32.totalorder %s67, %s68
    %p80 = scmp.eq.s32.totalorder %s16, 1
    %p81 = por %p79, %p80
    %p83 = scmp.ne.s32.totalorder %s68, %s82
    %p84 = scmp.eq.s32.totalorder %s16, 0
    %p85 = por %p83, %p84
    %s87 = sadd.s32 %s86, 1
    %p90 = scmp.eq.s32.totalorder %s10, 1
    %p91 = scmp.ne.s32.totalorder %s86, %s88
    %p92 = scmp.eq.s32.totalorder %s10, 0
    %p93 = por %p91, %p92
    %p94 = scmp.ne.s32.totalorder %s86, %s88
    %p95 = scmp.eq.s32.totalorder %s15, 1
    %p96 = por %p94, %p95
    %p97 = scmp.ne.s32.totalorder %s88, %s89
    %p98 = scmp.eq.s32.totalorder %s15, 0
    %p99 = por %p97, %p98
    %p100 = scmp.ne.s32.totalorder %s88, %s89
    %p101 = scmp.eq.s32.totalorder %s16, 1
    %p102 = por %p100, %p101
    %p104 = scmp.ne.s32.totalorder %s89, %s103
    %p105 = scmp.eq.s32.totalorder %s16, 0
    %p106 = por %p104, %p105
    %s107 = ssub.s32 %s10, %s17
    %p108 = scmp.eq.s32.totalorder %s107, 0
    %s110 = sadd.s32 %s109, 1
    %s111 = scalar_select %p108, %s109, %s110
    %p114 = pneg %p108
    %p115 = scmp.eq.s32.totalorder %s10, 1
    %p116 = por %p114, %p115
    %p117 = scmp.ne.s32.totalorder %s109, %s112
    %p118 = scmp.eq.s32.totalorder %s10, 0
    %p119 = por %p117, %p118
    %p120 = scmp.ne.s32.totalorder %s109, %s112
    %p121 = scmp.eq.s32.totalorder %s15, 1
    %p122 = por %p120, %p121
    %p123 = scmp.ne.s32.totalorder %s112, %s113
    %p124 = scmp.eq.s32.totalorder %s15, 0
    %p125 = por %p123, %p124
    %p126 = scmp.ne.s32.totalorder %s112, %s113
    %p127 = scmp.eq.s32.totalorder %s16, 1
    %p128 = por %p126, %p127
    %p130 = scmp.ne.s32.totalorder %s113, %s129
    %p131 = scmp.eq.s32.totalorder %s16, 0
    %p132 = por %p130, %p131
    %p133 = scmp.le.s32.totalorder 1, %s10
    %p134 = scmp.lt.s32.totalorder %s10, 3
    %p135 = pnand %p133, %p134
    %p136 = pneg %p135
    // Predicated region
    $region9: #{cdca_forward_pallas.1} parent=5 // pred_check
      _
    $region10: #{cdca_forward_pallas.1} parent=5 // pred_check_branch
      %138 = sbr.rel (%p135) target = $region12
    $region11: #{cdca_forward_pallas.1} parent=5 // pred_region
      %s139 = ssub.s32 %s10, 1
      // Predicated region
      $region13: #{cdca_forward_pallas.1} parent=11 // pred_check
        %p140 = pneg %p57
      $region14: #{cdca_forward_pallas.1} parent=11 // pred_check_branch
        %142 = sbr.rel (%p140) target = $region16
      $region15: #{cdca_forward_pallas.1} parent=11 // pred_region
        _
      $region16: #{cdca_forward_pallas.1} parent=11 // pred_fallthru
        _
      // Predicated region
      $region17: #{cdca_forward_pallas.1} parent=11 // pred_check
        %p143 = pneg %p78
      $region18: #{cdca_forward_pallas.1} parent=11 // pred_check_branch
        %145 = sbr.rel (%p143) target = $region20
      $region19: #{cdca_forward_pallas.1} parent=11 // pred_region
        _
      $region20: #{cdca_forward_pallas.1} parent=11 // pred_fallthru
        _
      // Predicated region
      $region21: #{cdca_forward_pallas.1} parent=11 // pred_check
        %p146 = pneg %p99
      $region22: #{cdca_forward_pallas.1} parent=11 // pred_check_branch
        %148 = sbr.rel (%p146) target = $region24
      $region23: #{cdca_forward_pallas.1} parent=11 // pred_region
        _
      $region24: #{cdca_forward_pallas.1} parent=11 // pred_fallthru
        _
    $region12: #{cdca_forward_pallas.1} parent=5 // pred_fallthru
      _
    %p149 = scmp.lt.s32.totalorder %s10, 2
    // Predicated region
    $region25: #{cdca_forward_pallas.1} parent=5 // pred_check
      %p150 = pneg %p149
    $region26: #{cdca_forward_pallas.1} parent=5 // pred_check_branch
      %152 = sbr.rel (%p150) target = $region28
    $region27: #{cdca_forward_pallas.1} parent=5 // pred_region
      // Predicated region
      $region29: #{cdca_forward_pallas.1} parent=27 // pred_check
        %p153 = pneg %p30
      $region30: #{cdca_forward_pallas.1} parent=27 // pred_check_branch
        %155 = sbr.rel (%p153) target = $region32
      $region31: #{cdca_forward_pallas.1} parent=27 // pred_region
        %p156 = scmp.lt.s32.totalorder %s10, 1
        %s157 = scalar_select %p156, %s10, 1
        %s158 = smul.addr %s157, 8
        %s159 = smul.addr %s158, 8
        %s160 = scalar_lea.vmem %s0, %s159
      $region32: #{cdca_forward_pallas.1} parent=27 // pred_fallthru
        _
    $region28: #{cdca_forward_pallas.1} parent=5 // pred_fallthru
      _
    %p161 = scmp.le.s32.totalorder 1, %s10
    %p162 = scmp.lt.s32.totalorder %s10, 3
    %p163 = pnand %p161, %p162
    %p164 = pneg %p163
    // Predicated region
    $region33: #{cdca_forward_pallas.1} parent=5 // pred_check
      _
    $region34: #{cdca_forward_pallas.1} parent=5 // pred_check_branch
      %166 = sbr.rel (%p163) target = $region36
    $region35: #{cdca_forward_pallas.1} parent=5 // pred_region
      %s167 = ssub.s32 %s10, 1
      %p168 = scmp.lt.s32.totalorder %s15, 1
      %s169 = scalar_select %p168, %s15, 1
      %s170 = smul.addr %s169, 8
      %s171 = smul.addr %s170, 8
      %s172 = scalar_lea.vmem %s0, %s171
      %p173 = pneg %p36
      %p174 = pneg %p33
      %p175 = pneg %p57
      %p176 = pneg %p54
      %p177 = pneg %p78
      %p178 = pneg %p75
      %p179 = pneg %p99
      %p180 = pneg %p96
      %p181 = pneg %p125
      %p182 = pneg %p122
      %p183 = scmp.lt.s32.totalorder %s15, 1
      %s184 = scalar_select %p183, %s15, 1
      %s185 = smul.addr %s184, 8
      %s186 = smul.addr %s185, 8
      %s187 = scalar_lea.vmem %s4, %s186
      %p188 = scmp.lt.s32.totalorder %s15, 1
      %s189 = scalar_select %p188, %s15, 1
      %s190 = smul.addr %s189, 8
      %s191 = smul.addr %s190, 8
      %s192 = scalar_lea.vmem %s0, %s191
      %p193 = scmp.lt.s32.totalorder %s15, 1
      %s194 = scalar_select %p193, %s15, 1
      %s195 = smul.addr %s194, 8
      %s196 = smul.addr %s195, 8
      %s197 = scalar_lea.vmem %s4, %s196
      %v198 = vld [vmem:[%s192] sm:$0xff]
      %v199 = vld [vmem:[%s192 + $0x8] sm:$0xff]
      %v200 = vld [vmem:[%s192 + $0x10] sm:$0xff]
      %v201 = vld [vmem:[%s192 + $0x18] sm:$0xff]
      %v202 = vld [vmem:[%s192 + $0x20] sm:$0xff]
      %v203 = vld [vmem:[%s192 + $0x28] sm:$0xff]
      %v204 = vld [vmem:[%s192 + $0x30] sm:$0xff]
      %v205 = vld [vmem:[%s192 + $0x38] sm:$0xff]
      %v206 = vld [vmem:[%s1] sm:$0xff]
      %v207 = vld [vmem:[%s1 + $0x8] sm:$0xff]
      %v208 = vld [vmem:[%s1 + $0x10] sm:$0xff]
      %v209 = vld [vmem:[%s1 + $0x18] sm:$0xff]
      %v210 = vld [vmem:[%s2] sm:$0xff]
      %v211 = vld [vmem:[%s3] ss:$4 sm:$0x3]
      %s212 = scalar_lea.vmem %s3, 1
      %v213 = vld [vmem:[%s212] ss:$4 sm:$0x3]
      %s214 = scalar_lea.vmem %s3, 2
      %v215 = vld [vmem:[%s214] ss:$4 sm:$0x3]
      %s216 = scalar_lea.vmem %s3, 3
      %v217 = vld [vmem:[%s216] ss:$4 sm:$0x3]
      %219 = vset.pattern.permute.xlu0 55
      %220 = vperm.xlu0 %219, %v206
      %v221 = vpop.permute.xlu0 %220
      %224 = vset.pattern.permute.xlu0 55
      %225 = vperm.xlu0 %224, %v207
      %v226 = vpop.permute.xlu0 %225
      %229 = vset.pattern.permute.xlu0 55
      %230 = vperm.xlu0 %229, %v208
      %v231 = vpop.permute.xlu0 %230
      %234 = vset.pattern.permute.xlu0 55
      %235 = vperm.xlu0 %234, %v209
      %v236 = vpop.permute.xlu0 %235
      %vm238 = vcmask 261120
      %v239 = vsel %vm238, %v206, 0
      %v241 = vsel %vm238, %v207, 0
      %v243 = vsel %vm238, %v208, 0
      %v245 = vsel %vm238, %v209, 0
      %247 = vmatprep.subr.mxu0 %v199
      %248 = vmatpush1.msra.mxu0 %v198
      %249 = vmatprep.subr.mxu0 %v201
      %250 = vmatpush1.msra.mxu0 %v200
      %251 = vmatprep.subr.mxu0 %v203
      %252 = vmatpush1.msra.mxu0 %v202
      %253 = vmatprep.subr.mxu0 %v205
      %254 = vmatpush1.msra.mxu0 %v204
      %255 = vmatprep.subr.mxu0 0.0
      %256 = vmatpush1.msra.mxu0 0.0
      %257 = vmatprep.subr.mxu0 0.0
      %258 = vmatpush1.msra.mxu0 0.0
      %259 = vmatprep.subr.mxu0 0.0
      %260 = vmatpush1.msra.mxu0 0.0
      %261 = vmatprep.subr.mxu0 0.0
      %262 = vmatpush1.msra.mxu0 0.0
      %263 = vmatprep.subr.mxu0 0.0
      %264 = vmatpush1.msra.mxu0 0.0
      %265 = vmatprep.subr.mxu0 0.0
      %266 = vmatpush1.msra.mxu0 0.0
      %267 = vmatprep.subr.mxu0 0.0
      %268 = vmatpush1.msra.mxu0 0.0
      %269 = vmatprep.subr.mxu0 0.0
      %270 = vmatpush1.msra.mxu0 0.0
      %271 = vmatprep.subr.mxu0 0.0
      %272 = vmatpush1.msra.mxu0 0.0
      %273 = vmatprep.subr.mxu0 0.0
      %274 = vmatpush1.msra.mxu0 0.0
      %275 = vmatprep.subr.mxu0 0.0
      %276 = vmatpush1.msra.mxu0 0.0
      %277 = vmatprep.subr.mxu0 0.0
      %278 = vmatpush1.msra.mxu0 0.0
      %279 = vmatprep.subr.mxu0 0.0
      %280 = vmatpush1.msra.mxu0 0.0
      %281 = vmatprep.subr.mxu0 0.0
      %282 = vmatpush1.msra.mxu0 0.0
      %283 = vmatprep.subr.mxu0 0.0
      %284 = vmatpush1.msra.mxu0 0.0
      %285 = vmatprep.subr.mxu0 0.0
      %286 = vmatpush1.msra.mxu0 0.0
      %287 = vmatprep.subr.mxu0 0.0
      %288 = vmatpush1.msra.mxu0 0.0
      %289 = vmatprep.subr.mxu0 0.0
      %290 = vmatpush1.msra.mxu0 0.0
      %291 = vmatprep.subr.mxu0 0.0
      %292 = vmatpush1.msra.mxu0 0.0
      %293 = vmatprep.subr.mxu0 0.0
      %294 = vmatpush1.msra.mxu0 0.0
      %295 = vmatprep.subr.mxu0 0.0
      %296 = vmatpush1.msra.mxu0 0.0
      %297 = vmatprep.subr.mxu0 0.0
      %298 = vmatpush1.msra.mxu0 0.0
      %299 = vmatprep.subr.mxu0 0.0
      %300 = vmatpush1.msra.mxu0 0.0
      %301 = vmatprep.subr.mxu0 0.0
      %302 = vmatpush1.msra.mxu0 0.0
      %303 = vmatprep.subr.mxu0 0.0
      %304 = vmatpush1.msra.mxu0 0.0
      %305 = vmatprep.subr.mxu0 0.0
      %306 = vmatpush1.msra.mxu0 0.0
      %307 = vmatprep.subr.mxu0 0.0
      %308 = vmatpush1.msra.mxu0 0.0
      %309 = vmatprep.subr.mxu0 0.0
      %310 = vmatpush1.msra.mxu0 0.0
      %311 = vmatprep.mubr.f32.mxu0 0.0
      %312 = vmatmul.mubr.f32.gmra.mrb[0].mxu0 %v239
      %v313 = vpop.f32.mrb[0].mxu0
      %v314 = vadd.f32 %v221, %v313
      %v315 = vpop.f32.mrb[0].mxu0
      %v316 = vadd.f32 %v221, %v315
      %317 = vmatprep.mubr.f32.mxu0 0.0
      %318 = vmatmul.mubr.f32.gmra.mrb[0].mxu0 %v241
      %v319 = vpop.f32.mrb[0].mxu0
      %v320 = vadd.f32 %v226, %v319
      %v321 = vpop.f32.mrb[0].mxu0
      %v322 = vadd.f32 %v226, %v321
      %323 = vmatprep.mubr.f32.mxu0 0.0
      %324 = vmatmul.mubr.f32.gmra.mrb[0].mxu0 %v243
      %v325 = vpop.f32.mrb[0].mxu0
      %v326 = vadd.f32 %v231, %v325
      %v327 = vpop.f32.mrb[0].mxu0
      %v328 = vadd.f32 %v231, %v327
      %329 = vmatprep.mubr.f32.mxu0 0.0
      %330 = vmatmul.mubr.f32.gmra.mrb[0].mxu0 %v245
      %v331 = vpop.f32.mrb[0].mxu0
      %v332 = vadd.f32 %v236, %v331
      %v333 = vpop.f32.mrb[0].mxu0
      %v334 = vadd.f32 %v236, %v333
      %335 = vdwg.mxu0
      %v336 = vmul.f32 %v314, 0.5
      %v337 = vmul.f32 %v316, 0.5
      %v338 = vmul.f32 %v320, 0.5
      %v339 = vmul.f32 %v322, 0.5
      %v340 = vmul.f32 %v326, 0.5
      %v341 = vmul.f32 %v328, 0.5
      %v342 = vmul.f32 %v332, 0.5
      %v343 = vmul.f32 %v334, 0.5
      %v344 = vmul.f32 %v314, 0.044715
      %v345 = vmul.f32 %v316, 0.044715
      %v346 = vmul.f32 %v320, 0.044715
      %v347 = vmul.f32 %v322, 0.044715
      %v348 = vmul.f32 %v326, 0.044715
      %v349 = vmul.f32 %v328, 0.044715
      %v350 = vmul.f32 %v332, 0.044715
      %v351 = vmul.f32 %v334, 0.044715
      %v352 = vmul.f32 %v344, %v314
      %v353 = vmul.f32 %v345, %v316
      %v354 = vmul.f32 %v346, %v320
      %v355 = vmul.f32 %v347, %v322
      %v356 = vmul.f32 %v348, %v326
      %v357 = vmul.f32 %v349, %v328
      %v358 = vmul.f32 %v350, %v332
      %v359 = vmul.f32 %v351, %v334
      %v360 = vmul.f32 %v352, %v314
      %v361 = vmul.f32 %v353, %v316
      %v362 = vmul.f32 %v354, %v320
      %v363 = vmul.f32 %v355, %v322
      %v364 = vmul.f32 %v356, %v326
      %v365 = vmul.f32 %v357, %v328
      %v366 = vmul.f32 %v358, %v332
      %v367 = vmul.f32 %v359, %v334
      %v368 = vadd.f32 %v314, %v360
      %v369 = vadd.f32 %v316, %v361
      %v370 = vadd.f32 %v320, %v362
      %v371 = vadd.f32 %v322, %v363
      %v372 = vadd.f32 %v326, %v364
      %v373 = vadd.f32 %v328, %v365
      %v374 = vadd.f32 %v332, %v366
      %v375 = vadd.f32 %v334, %v367
      %v376 = vmul.f32 %v368, 0.7978846
      %v377 = vmul.f32 %v369, 0.7978846
      %v378 = vmul.f32 %v370, 0.7978846
      %v379 = vmul.f32 %v371, 0.7978846
      %v380 = vmul.f32 %v372, 0.7978846
      %v381 = vmul.f32 %v373, 0.7978846
      %v382 = vmul.f32 %v374, 0.7978846
      %v383 = vmul.f32 %v375, 0.7978846
      %v384 = vtanh.pop %v376
      %v385 = vtanh.pop %v377
      %v386 = vtanh.pop %v378
      %v387 = vtanh.pop %v379
      %v388 = vtanh.pop %v380
      %v389 = vtanh.pop %v381
      %v390 = vtanh.pop %v382
      %v391 = vtanh.pop %v383
      %v392 = vadd.f32 %v384, 1.0
      %v393 = vadd.f32 %v385, 1.0
      %v394 = vadd.f32 %v386, 1.0
      %v395 = vadd.f32 %v387, 1.0
      %v396 = vadd.f32 %v388, 1.0
      %v397 = vadd.f32 %v389, 1.0
      %v398 = vadd.f32 %v390, 1.0
      %v399 = vadd.f32 %v391, 1.0
      %v400 = vmul.f32 %v336, %v392
      %v401 = vmul.f32 %v337, %v393
      %v402 = vmul.f32 %v338, %v394
      %v403 = vmul.f32 %v339, %v395
      %v404 = vmul.f32 %v340, %v396
      %v405 = vmul.f32 %v341, %v397
      %v406 = vmul.f32 %v342, %v398
      %v407 = vmul.f32 %v343, %v399
      %v408 = vadd.f32 %v400, %v401
      %409 = vadd.xlane.f32.xlu0 %v408
      %v410 = vpop.xlane.xlu0 %409
      %v411 = vadd.f32 %v402, %v403
      %412 = vadd.xlane.f32.xlu0 %v411
      %v413 = vpop.xlane.xlu0 %412
      %v414 = vadd.f32 %v404, %v405
      %415 = vadd.xlane.f32.xlu0 %v414
      %v416 = vpop.xlane.xlu0 %415
      %v417 = vadd.f32 %v406, %v407
      %418 = vadd.xlane.f32.xlu0 %v417
      %v419 = vpop.xlane.xlu0 %418
      %v420 = vmul.f32 %v410, 0.00390625
      %v421 = vmul.f32 %v413, 0.00390625
      %v422 = vmul.f32 %v416, 0.00390625
      %v423 = vmul.f32 %v419, 0.00390625
      %v424 = vmax.f32 %v400, %v401
      %425 = vmax.xlane.f32.xlu0 %v424
      %v426 = vpop.xlane.xlu0 %425
      %v427 = vmax.f32 %v402, %v403
      %428 = vmax.xlane.f32.xlu0 %v427
      %v429 = vpop.xlane.xlu0 %428
      %v430 = vmax.f32 %v404, %v405
      %431 = vmax.xlane.f32.xlu0 %v430
      %v432 = vpop.xlane.xlu0 %431
      %v433 = vmax.f32 %v406, %v407
      %434 = vmax.xlane.f32.xlu0 %v433
      %v435 = vpop.xlane.xlu0 %434
      %vm436 = vcmask 7168
      %v437 = vsel %vm436, %v420, %v426
      %v438 = vsel %vm436, %v421, %v429
      %v439 = vsel %vm436, %v422, %v432
      %v440 = vsel %vm436, %v423, %v435
      %442 = vset.pattern.permute.xlu0 32
      %443 = vperm.xlu0 %442, %v210
      %v444 = vpop.permute.xlu0 %443
      %v446 = vsel %vm238, %v210, 0
      %448 = vmatprep.subr.mxu0 0.0
      %449 = vmatpush1.msra.mxu0 %v437
      %450 = vmatprep.subr.mxu0 0.0
      %451 = vmatpush1.msra.mxu0 %v438
      %452 = vmatprep.subr.mxu0 0.0
      %453 = vmatpush1.msra.mxu0 %v439
      %454 = vmatprep.subr.mxu0 0.0
      %455 = vmatpush1.msra.mxu0 %v440
      %456 = vmatprep.subr.mxu0 0.0
      %457 = vmatpush1.msra.mxu0 0.0
      %458 = vmatprep.subr.mxu0 0.0
      %459 = vmatpush1.msra.mxu0 0.0
      %460 = vmatprep.subr.mxu0 0.0
      %461 = vmatpush1.msra.mxu0 0.0
      %462 = vmatprep.subr.mxu0 0.0
      %463 = vmatpush1.msra.mxu0 0.0
      %464 = vmatprep.subr.mxu0 0.0
      %465 = vmatpush1.msra.mxu0 0.0
      %466 = vmatprep.subr.mxu0 0.0
      %467 = vmatpush1.msra.mxu0 0.0
      %468 = vmatprep.subr.mxu0 0.0
      %469 = vmatpush1.msra.mxu0 0.0
      %470 = vmatprep.subr.mxu0 0.0
      %471 = vmatpush1.msra.mxu0 0.0
      %472 = vmatprep.subr.mxu0 0.0
      %473 = vmatpush1.msra.mxu0 0.0
      %474 = vmatprep.subr.mxu0 0.0
      %475 = vmatpush1.msra.mxu0 0.0
      %476 = vmatprep.subr.mxu0 0.0
      %477 = vmatpush1.msra.mxu0 0.0
      %478 = vmatprep.subr.mxu0 0.0
      %479 = vmatpush1.msra.mxu0 0.0
      %480 = vmatprep.subr.mxu0 0.0
      %481 = vmatpush1.msra.mxu0 0.0
      %482 = vmatprep.subr.mxu0 0.0
      %483 = vmatpush1.msra.mxu0 0.0
      %484 = vmatprep.subr.mxu0 0.0
      %485 = vmatpush1.msra.mxu0 0.0
      %486 = vmatprep.subr.mxu0 0.0
      %487 = vmatpush1.msra.mxu0 0.0
      %488 = vmatprep.subr.mxu0 0.0
      %489 = vmatpush1.msra.mxu0 0.0
      %490 = vmatprep.subr.mxu0 0.0
      %491 = vmatpush1.msra.mxu0 0.0
      %492 = vmatprep.subr.mxu0 0.0
      %493 = vmatpush1.msra.mxu0 0.0
      %494 = vmatprep.subr.mxu0 0.0
      %495 = vmatpush1.msra.mxu0 0.0
      %496 = vmatprep.subr.mxu0 0.0
      %497 = vmatpush1.msra.mxu0 0.0
      %498 = vmatprep.subr.mxu0 0.0
      %499 = vmatpush1.msra.mxu0 0.0
      %500 = vmatprep.subr.mxu0 0.0
      %501 = vmatpush1.msra.mxu0 0.0
      %502 = vmatprep.subr.mxu0 0.0
      %503 = vmatpush1.msra.mxu0 0.0
      %504 = vmatprep.subr.mxu0 0.0
      %505 = vmatpush1.msra.mxu0 0.0
      %506 = vmatprep.subr.mxu0 0.0
      %507 = vmatpush1.msra.mxu0 0.0
      %508 = vmatprep.subr.mxu0 0.0
      %509 = vmatpush1.msra.mxu0 0.0
      %510 = vmatprep.subr.mxu0 0.0
      %511 = vmatpush1.msra.mxu0 0.0
      %512 = vmatprep.mubr.f32.mxu0 0.0
      %513 = vmatmul.mubr.f32.gmra.mrb[0].mxu0 %v446
      %v514 = vpop.f32.mrb[0].mxu0
      %v515 = vadd.f32 %v444, %v514
      %v516 = vpop.f32.mrb[0].mxu0
      %517 = vdwg.mxu0
      %v518 = vmax.f32 %v515, 0.0
      %519 = vset.pattern.permute.xlu0 56
      %520 = vperm.xlu0 %519, %v206
      %v521 = vpop.permute.xlu0 %520
      %523 = vset.pattern.permute.xlu0 56
      %524 = vperm.xlu0 %523, %v207
      %v525 = vpop.permute.xlu0 %524
      %527 = vset.pattern.permute.xlu0 56
      %528 = vperm.xlu0 %527, %v208
      %v529 = vpop.permute.xlu0 %528
      %531 = vset.pattern.permute.xlu0 56
      %532 = vperm.xlu0 %531, %v209
      %v533 = vpop.permute.xlu0 %532
      %535 = vrot.lane.b32.xlu0 %v206, 96
      %v536 = vpop.permute.xlu0 %535
      %537 = vrot.lane.b32.xlu0 %v207, 96
      %v538 = vpop.permute.xlu0 %537
      %539 = vrot.lane.b32.xlu0 %v208, 96
      %v540 = vpop.permute.xlu0 %539
      %541 = vrot.lane.b32.xlu0 %v209, 96
      %v542 = vpop.permute.xlu0 %541
      %vm543 = vcmask 64512
      %v544 = vsel %vm543, %v536, 0
      %v546 = vsel %vm543, %v538, 0
      %v548 = vsel %vm543, %v540, 0
      %v550 = vsel %vm543, %v542, 0
      %552 = vmatprep.subr.mxu0 0.0
      %553 = vmatpush1.msra.mxu0 %v518
      %554 = vmatprep.subr.mxu0 0.0
      %555 = vmatpush1.msra.mxu0 0.0
      %556 = vmatprep.subr.mxu0 0.0
      %557 = vmatpush1.msra.mxu0 0.0
      %558 = vmatprep.subr.mxu0 0.0
      %559 = vmatpush1.msra.mxu0 0.0
      %560 = vmatprep.subr.mxu0 0.0
      %561 = vmatpush1.msra.mxu0 0.0
      %562 = vmatprep.subr.mxu0 0.0
      %563 = vmatpush1.msra.mxu0 0.0
      %564 = vmatprep.subr.mxu0 0.0
      %565 = vmatpush1.msra.mxu0 0.0
      %566 = vmatprep.subr.mxu0 0.0
      %567 = vmatpush1.msra.mxu0 0.0
      %568 = vmatprep.subr.mxu0 0.0
      %569 = vmatpush1.msra.mxu0 0.0
      %570 = vmatprep.subr.mxu0 0.0
      %571 = vmatpush1.msra.mxu0 0.0
      %572 = vmatprep.subr.mxu0 0.0
      %573 = vmatpush1.msra.mxu0 0.0
      %574 = vmatprep.subr.mxu0 0.0
      %575 = vmatpush1.msra.mxu0 0.0
      %576 = vmatprep.subr.mxu0 0.0
      %577 = vmatpush1.msra.mxu0 0.0
      %578 = vmatprep.subr.mxu0 0.0
      %579 = vmatpush1.msra.mxu0 0.0
      %580 = vmatprep.subr.mxu0 0.0
      %581 = vmatpush1.msra.mxu0 0.0
      %582 = vmatprep.subr.mxu0 0.0
      %583 = vmatpush1.msra.mxu0 0.0
      %584 = vmatprep.subr.mxu0 0.0
      %585 = vmatpush1.msra.mxu0 0.0
      %586 = vmatprep.subr.mxu0 0.0
      %587 = vmatpush1.msra.mxu0 0.0
      %588 = vmatprep.subr.mxu0 0.0
      %589 = vmatpush1.msra.mxu0 0.0
      %590 = vmatprep.subr.mxu0 0.0
      %591 = vmatpush1.msra.mxu0 0.0
      %592 = vmatprep.subr.mxu0 0.0
      %593 = vmatpush1.msra.mxu0 0.0
      %594 = vmatprep.subr.mxu0 0.0
      %595 = vmatpush1.msra.mxu0 0.0
      %596 = vmatprep.subr.mxu0 0.0
      %597 = vmatpush1.msra.mxu0 0.0
      %598 = vmatprep.subr.mxu0 0.0
      %599 = vmatpush1.msra.mxu0 0.0
      %600 = vmatprep.subr.mxu0 0.0
      %601 = vmatpush1.msra.mxu0 0.0
      %602 = vmatprep.subr.mxu0 0.0
      %603 = vmatpush1.msra.mxu0 0.0
      %604 = vmatprep.subr.mxu0 0.0
      %605 = vmatpush1.msra.mxu0 0.0
      %606 = vmatprep.subr.mxu0 0.0
      %607 = vmatpush1.msra.mxu0 0.0
      %608 = vmatprep.subr.mxu0 0.0
      %609 = vmatpush1.msra.mxu0 0.0
      %610 = vmatprep.subr.mxu0 0.0
      %611 = vmatpush1.msra.mxu0 0.0
      %612 = vmatprep.subr.mxu0 0.0
      %613 = vmatpush1.msra.mxu0 0.0
      %614 = vmatprep.subr.mxu0 0.0
      %615 = vmatpush1.msra.mxu0 0.0
      %616 = vmatprep.mubr.f32.mxu0 0.0
      %617 = vmatmul.mubr.f32.gmra.mrb[0].mxu0 %v544
      %v618 = vpop.f32.mrb[0].mxu0
      %v619 = vadd.f32 %v521, %v618
      %v620 = vpop.f32.mrb[0].mxu0
      %621 = vmatprep.mubr.f32.mxu0 0.0
      %622 = vmatmul.mubr.f32.gmra.mrb[0].mxu0 %v546
      %v623 = vpop.f32.mrb[0].mxu0
      %v624 = vadd.f32 %v525, %v623
      %v625 = vpop.f32.mrb[0].mxu0
      %626 = vmatprep.mubr.f32.mxu0 0.0
      %627 = vmatmul.mubr.f32.gmra.mrb[0].mxu0 %v548
      %v628 = vpop.f32.mrb[0].mxu0
      %v629 = vadd.f32 %v529, %v628
      %v630 = vpop.f32.mrb[0].mxu0
      %631 = vmatprep.mubr.f32.mxu0 0.0
      %632 = vmatmul.mubr.f32.gmra.mrb[0].mxu0 %v550
      %v633 = vpop.f32.mrb[0].mxu0
      %v634 = vadd.f32 %v533, %v633
      %v635 = vpop.f32.mrb[0].mxu0
      %636 = vdwg.mxu0
      %v637 = vmul.f32 %v619, 0.5
      %v638 = vmul.f32 %v624, 0.5
      %v639 = vmul.f32 %v629, 0.5
      %v640 = vmul.f32 %v634, 0.5
      %v641 = vtanh.pop %v637
      %v642 = vtanh.pop %v638
      %v643 = vtanh.pop %v639
      %v644 = vtanh.pop %v640
      %v645 = vadd.f32 %v641, 1.0
      %v646 = vadd.f32 %v642, 1.0
      %v647 = vadd.f32 %v643, 1.0
      %v648 = vadd.f32 %v644, 1.0
      %v649 = vmul.f32 %v645, 0.5
      %v650 = vmul.f32 %v646, 0.5
      %v651 = vmul.f32 %v647, 0.5
      %v652 = vmul.f32 %v648, 0.5
      %vm653 = vcmask 15360
      %v654 = vsel %vm653, %v649, 0.0
      %655 = vadd.xlane.f32.xlu0 %v654
      %v656 = vpop.xlane.xlu0 %655
      %v657 = vsel %vm653, %v650, 0.0
      %658 = vadd.xlane.f32.xlu0 %v657
      %v659 = vpop.xlane.xlu0 %658
      %v660 = vsel %vm653, %v651, 0.0
      %661 = vadd.xlane.f32.xlu0 %v660
      %v662 = vpop.xlane.xlu0 %661
      %v663 = vsel %vm653, %v652, 0.0
      %664 = vadd.xlane.f32.xlu0 %v663
      %v665 = vpop.xlane.xlu0 %664
      %v666 = vmul.f32 %v400, %v656
      %v667 = vmul.f32 %v401, %v656
      %v668 = vmul.f32 %v402, %v659
      %v669 = vmul.f32 %v403, %v659
      %v670 = vmul.f32 %v404, %v662
      %v671 = vmul.f32 %v405, %v662
      %v672 = vmul.f32 %v406, %v665
      %v673 = vmul.f32 %v407, %v665
      %674 = vrot.lane.b32.xlu0 %v666, 1
      %v675 = vpop.permute.xlu0 %674
      %676 = vrot.lane.b32.xlu0 %v668, 1
      %v677 = vpop.permute.xlu0 %676
      %678 = vrot.lane.b32.xlu0 %v670, 1
      %v679 = vpop.permute.xlu0 %678
      %680 = vrot.lane.b32.xlu0 %v672, 1
      %v681 = vpop.permute.xlu0 %680
      %682 = vrot.lane.b32.xlu0 %v667, 1
      %v683 = vpop.permute.xlu0 %682
      %684 = vrot.lane.b32.xlu0 %v669, 1
      %v685 = vpop.permute.xlu0 %684
      %686 = vrot.lane.b32.xlu0 %v671, 1
      %v687 = vpop.permute.xlu0 %686
      %688 = vrot.lane.b32.xlu0 %v673, 1
      %v689 = vpop.permute.xlu0 %688
      %v690 = vlaneseq
      %v691 = vand.u32 %v690, 127
      %vm692 = vcmp.lt.s32.totalorder %v691, 1
      %v693 = vsel %vm692, %v675, %v683
      %v694 = vsel %vm692, %v677, %v685
      %v695 = vsel %vm692, %v679, %v687
      %v696 = vsel %vm692, %v681, %v689
      %v697 = vsel %vm692, %v683, %v675
      %v698 = vsel %vm692, %v685, %v677
      %v699 = vsel %vm692, %v687, %v679
      %v700 = vsel %vm692, %v689, %v681
      %v702 = vlaneseq
      %v703 = vshrl.u32 %v702, 7
      %v704 = vsub.s32 0, %v703
      %v705 = vrot.slane %v211, %v704
      %v706 = vlaneseq
      %v707 = vshrl.u32 %v706, 7
      %v708 = vsub.s32 1, %v707
      %v709 = vrot.slane %v211, %v708
      %v712 = vmul.f32 %v705, %v697
      %v713 = vmul.f32 %v709, %v693
      %v714 = vmul.f32 %v705, %v698
      %v715 = vmul.f32 %v709, %v694
      %v716 = vmul.f32 %v705, %v699
      %v717 = vmul.f32 %v709, %v695
      %v718 = vmul.f32 %v705, %v700
      %v719 = vmul.f32 %v709, %v696
      %720 = vrot.lane.b32.xlu0 %v666, 127
      %v721 = vpop.permute.xlu0 %720
      %722 = vrot.lane.b32.xlu0 %v668, 127
      %v723 = vpop.permute.xlu0 %722
      %724 = vrot.lane.b32.xlu0 %v670, 127
      %v725 = vpop.permute.xlu0 %724
      %726 = vrot.lane.b32.xlu0 %v672, 127
      %v727 = vpop.permute.xlu0 %726
      %728 = vrot.lane.b32.xlu0 %v667, 127
      %v729 = vpop.permute.xlu0 %728
      %730 = vrot.lane.b32.xlu0 %v669, 127
      %v731 = vpop.permute.xlu0 %730
      %732 = vrot.lane.b32.xlu0 %v671, 127
      %v733 = vpop.permute.xlu0 %732
      %734 = vrot.lane.b32.xlu0 %v673, 127
      %v735 = vpop.permute.xlu0 %734
      %vm736 = vcmp.lt.s32.totalorder %v691, 127
      %v737 = vsel %vm736, %v721, %v729
      %v738 = vsel %vm736, %v723, %v731
      %v739 = vsel %vm736, %v725, %v733
      %v740 = vsel %vm736, %v727, %v735
      %v741 = vsel %vm736, %v729, %v721
      %v742 = vsel %vm736, %v731, %v723
      %v743 = vsel %vm736, %v733, %v725
      %v744 = vsel %vm736, %v735, %v727
      %v746 = vlaneseq
      %v747 = vshrl.u32 %v746, 7
      %v748 = vsub.s32 0, %v747
      %v749 = vrot.slane %v213, %v748
      %v750 = vlaneseq
      %v751 = vshrl.u32 %v750, 7
      %v752 = vsub.s32 1, %v751
      %v753 = vrot.slane %v213, %v752
      %v756 = vmul.f32 %v749, %v737
      %v757 = vmul.f32 %v753, %v741
      %v758 = vmul.f32 %v749, %v738
      %v759 = vmul.f32 %v753, %v742
      %v760 = vmul.f32 %v749, %v739
      %v761 = vmul.f32 %v753, %v743
      %v762 = vmul.f32 %v749, %v740
      %v763 = vmul.f32 %v753, %v744
      %764 = vrot.lane.b32.xlu0 %v712, 16
      %v765 = vpop.permute.xlu0 %764
      %766 = vrot.lane.b32.xlu0 %v714, 16
      %v767 = vpop.permute.xlu0 %766
      %768 = vrot.lane.b32.xlu0 %v716, 16
      %v769 = vpop.permute.xlu0 %768
      %770 = vrot.lane.b32.xlu0 %v718, 16
      %v771 = vpop.permute.xlu0 %770
      %772 = vrot.lane.b32.xlu0 %v713, 16
      %v773 = vpop.permute.xlu0 %772
      %774 = vrot.lane.b32.xlu0 %v715, 16
      %v775 = vpop.permute.xlu0 %774
      %776 = vrot.lane.b32.xlu0 %v717, 16
      %v777 = vpop.permute.xlu0 %776
      %778 = vrot.lane.b32.xlu0 %v719, 16
      %v779 = vpop.permute.xlu0 %778
      %vm780 = vcmp.lt.s32.totalorder %v691, 16
      %v781 = vsel %vm780, %v765, %v773
      %v782 = vsel %vm780, %v767, %v775
      %v783 = vsel %vm780, %v769, %v777
      %v784 = vsel %vm780, %v771, %v779
      %v785 = vsel %vm780, %v773, %v765
      %v786 = vsel %vm780, %v775, %v767
      %v787 = vsel %vm780, %v777, %v769
      %v788 = vsel %vm780, %v779, %v771
      %v790 = vlaneseq
      %v791 = vshrl.u32 %v790, 7
      %v792 = vsub.s32 0, %v791
      %v793 = vrot.slane %v215, %v792
      %v794 = vlaneseq
      %v795 = vshrl.u32 %v794, 7
      %v796 = vsub.s32 1, %v795
      %v797 = vrot.slane %v215, %v796
      %v800 = vmul.f32 %v785, %v793
      %v801 = vmul.f32 %v781, %v797
      %v802 = vmul.f32 %v786, %v793
      %v803 = vmul.f32 %v782, %v797
      %v804 = vmul.f32 %v787, %v793
      %v805 = vmul.f32 %v783, %v797
      %v806 = vmul.f32 %v788, %v793
      %v807 = vmul.f32 %v784, %v797
      %808 = vset.pattern.permute.xlu0 40
      %809 = vperm.xlu0 %808, %v206
      %v810 = vpop.permute.xlu0 %809
      %812 = vset.pattern.permute.xlu0 40
      %813 = vperm.xlu0 %812, %v207
      %v814 = vpop.permute.xlu0 %813
      %816 = vset.pattern.permute.xlu0 40
      %817 = vperm.xlu0 %816, %v208
      %v818 = vpop.permute.xlu0 %817
      %820 = vset.pattern.permute.xlu0 40
      %821 = vperm.xlu0 %820, %v209
      %v822 = vpop.permute.xlu0 %821
      %v824 = vmul.f32 %v800, %v810
      %v825 = vmul.f32 %v801, %v810
      %v826 = vmul.f32 %v802, %v814
      %v827 = vmul.f32 %v803, %v814
      %v828 = vmul.f32 %v804, %v818
      %v829 = vmul.f32 %v805, %v818
      %v830 = vmul.f32 %v806, %v822
      %v831 = vmul.f32 %v807, %v822
      %v832 = vadd.f32 %v824, 0.0
      %v833 = vadd.f32 %v825, 0.0
      %v834 = vadd.f32 %v826, 0.0
      %v835 = vadd.f32 %v827, 0.0
      %v836 = vadd.f32 %v828, 0.0
      %v837 = vadd.f32 %v829, 0.0
      %v838 = vadd.f32 %v830, 0.0
      %v839 = vadd.f32 %v831, 0.0
      %840 = vrot.lane.b32.xlu0 %v666, 16
      %v841 = vpop.permute.xlu0 %840
      %842 = vrot.lane.b32.xlu0 %v668, 16
      %v843 = vpop.permute.xlu0 %842
      %844 = vrot.lane.b32.xlu0 %v670, 16
      %v845 = vpop.permute.xlu0 %844
      %846 = vrot.lane.b32.xlu0 %v672, 16
      %v847 = vpop.permute.xlu0 %846
      %848 = vrot.lane.b32.xlu0 %v667, 16
      %v849 = vpop.permute.xlu0 %848
      %850 = vrot.lane.b32.xlu0 %v669, 16
      %v851 = vpop.permute.xlu0 %850
      %852 = vrot.lane.b32.xlu0 %v671, 16
      %v853 = vpop.permute.xlu0 %852
      %854 = vrot.lane.b32.xlu0 %v673, 16
      %v855 = vpop.permute.xlu0 %854
      %v856 = vsel %vm780, %v841, %v849
      %v857 = vsel %vm780, %v843, %v851
      %v858 = vsel %vm780, %v845, %v853
      %v859 = vsel %vm780, %v847, %v855
      %v860 = vsel %vm780, %v849, %v841
      %v861 = vsel %vm780, %v851, %v843
      %v862 = vsel %vm780, %v853, %v845
      %v863 = vsel %vm780, %v855, %v847
      %v864 = vmul.f32 %v860, %v793
      %v865 = vmul.f32 %v856, %v797
      %v866 = vmul.f32 %v861, %v793
      %v867 = vmul.f32 %v857, %v797
      %v868 = vmul.f32 %v862, %v793
      %v869 = vmul.f32 %v858, %v797
      %v870 = vmul.f32 %v863, %v793
      %v871 = vmul.f32 %v859, %v797
      %872 = vset.pattern.permute.xlu0 41
      %873 = vperm.xlu0 %872, %v206
      %v874 = vpop.permute.xlu0 %873
      %876 = vset.pattern.permute.xlu0 41
      %877 = vperm.xlu0 %876, %v207
      %v878 = vpop.permute.xlu0 %877
      %880 = vset.pattern.permute.xlu0 41
      %881 = vperm.xlu0 %880, %v208
      %v882 = vpop.permute.xlu0 %881
      %884 = vset.pattern.permute.xlu0 41
      %885 = vperm.xlu0 %884, %v209
      %v886 = vpop.permute.xlu0 %885
      %v888 = vmul.f32 %v864, %v874
      %v889 = vmul.f32 %v865, %v874
      %v890 = vmul.f32 %v866, %v878
      %v891 = vmul.f32 %v867, %v878
      %v892 = vmul.f32 %v868, %v882
      %v893 = vmul.f32 %v869, %v882
      %v894 = vmul.f32 %v870, %v886
      %v895 = vmul.f32 %v871, %v886
      %v896 = vadd.f32 %v832, %v888
      %v897 = vadd.f32 %v833, %v889
      %v898 = vadd.f32 %v834, %v890
      %v899 = vadd.f32 %v835, %v891
      %v900 = vadd.f32 %v836, %v892
      %v901 = vadd.f32 %v837, %v893
      %v902 = vadd.f32 %v838, %v894
      %v903 = vadd.f32 %v839, %v895
      %904 = vrot.lane.b32.xlu0 %v756, 16
      %v905 = vpop.permute.xlu0 %904
      %906 = vrot.lane.b32.xlu0 %v758, 16
      %v907 = vpop.permute.xlu0 %906
      %908 = vrot.lane.b32.xlu0 %v760, 16
      %v909 = vpop.permute.xlu0 %908
      %910 = vrot.lane.b32.xlu0 %v762, 16
      %v911 = vpop.permute.xlu0 %910
      %912 = vrot.lane.b32.xlu0 %v757, 16
      %v913 = vpop.permute.xlu0 %912
      %914 = vrot.lane.b32.xlu0 %v759, 16
      %v915 = vpop.permute.xlu0 %914
      %916 = vrot.lane.b32.xlu0 %v761, 16
      %v917 = vpop.permute.xlu0 %916
      %918 = vrot.lane.b32.xlu0 %v763, 16
      %v919 = vpop.permute.xlu0 %918
      %v920 = vsel %vm780, %v905, %v913
      %v921 = vsel %vm780, %v907, %v915
      %v922 = vsel %vm780, %v909, %v917
      %v923 = vsel %vm780, %v911, %v919
      %v924 = vsel %vm780, %v913, %v905
      %v925 = vsel %vm780, %v915, %v907
      %v926 = vsel %vm780, %v917, %v909
      %v927 = vsel %vm780, %v919, %v911
      %v928 = vmul.f32 %v924, %v793
      %v929 = vmul.f32 %v920, %v797
      %v930 = vmul.f32 %v925, %v793
      %v931 = vmul.f32 %v921, %v797
      %v932 = vmul.f32 %v926, %v793
      %v933 = vmul.f32 %v922, %v797
      %v934 = vmul.f32 %v927, %v793
      %v935 = vmul.f32 %v923, %v797
      %936 = vset.pattern.permute.xlu0 42
      %937 = vperm.xlu0 %936, %v206
      %v938 = vpop.permute.xlu0 %937
      %940 = vset.pattern.permute.xlu0 42
      %941 = vperm.xlu0 %940, %v207
      %v942 = vpop.permute.xlu0 %941
      %944 = vset.pattern.permute.xlu0 42
      %945 = vperm.xlu0 %944, %v208
      %v946 = vpop.permute.xlu0 %945
      %948 = vset.pattern.permute.xlu0 42
      %949 = vperm.xlu0 %948, %v209
      %v950 = vpop.permute.xlu0 %949
      %v952 = vmul.f32 %v928, %v938
      %v953 = vmul.f32 %v929, %v938
      %v954 = vmul.f32 %v930, %v942
      %v955 = vmul.f32 %v931, %v942
      %v956 = vmul.f32 %v932, %v946
      %v957 = vmul.f32 %v933, %v946
      %v958 = vmul.f32 %v934, %v950
      %v959 = vmul.f32 %v935, %v950
      %v960 = vadd.f32 %v896, %v952
      %v961 = vadd.f32 %v897, %v953
      %v962 = vadd.f32 %v898, %v954
      %v963 = vadd.f32 %v899, %v955
      %v964 = vadd.f32 %v900, %v956
      %v965 = vadd.f32 %v901, %v957
      %v966 = vadd.f32 %v902, %v958
      %v967 = vadd.f32 %v903, %v959
      %968 = vset.pattern.permute.xlu0 43
      %969 = vperm.xlu0 %968, %v206
      %v970 = vpop.permute.xlu0 %969
      %972 = vset.pattern.permute.xlu0 43
      %973 = vperm.xlu0 %972, %v207
      %v974 = vpop.permute.xlu0 %973
      %976 = vset.pattern.permute.xlu0 43
      %977 = vperm.xlu0 %976, %v208
      %v978 = vpop.permute.xlu0 %977
      %980 = vset.pattern.permute.xlu0 43
      %981 = vperm.xlu0 %980, %v209
      %v982 = vpop.permute.xlu0 %981
      %v984 = vmul.f32 %v712, %v970
      %v985 = vmul.f32 %v713, %v970
      %v986 = vmul.f32 %v714, %v974
      %v987 = vmul.f32 %v715, %v974
      %v988 = vmul.f32 %v716, %v978
      %v989 = vmul.f32 %v717, %v978
      %v990 = vmul.f32 %v718, %v982
      %v991 = vmul.f32 %v719, %v982
      %v992 = vadd.f32 %v960, %v984
      %v993 = vadd.f32 %v961, %v985
      %v994 = vadd.f32 %v962, %v986
      %v995 = vadd.f32 %v963, %v987
      %v996 = vadd.f32 %v964, %v988
      %v997 = vadd.f32 %v965, %v989
      %v998 = vadd.f32 %v966, %v990
      %v999 = vadd.f32 %v967, %v991
      %1000 = vset.pattern.permute.xlu0 44
      %1001 = vperm.xlu0 %1000, %v206
      %v1002 = vpop.permute.xlu0 %1001
      %1004 = vset.pattern.permute.xlu0 44
      %1005 = vperm.xlu0 %1004, %v207
      %v1006 = vpop.permute.xlu0 %1005
      %1008 = vset.pattern.permute.xlu0 44
      %1009 = vperm.xlu0 %1008, %v208
      %v1010 = vpop.permute.xlu0 %1009
      %1012 = vset.pattern.permute.xlu0 44
      %1013 = vperm.xlu0 %1012, %v209
      %v1014 = vpop.permute.xlu0 %1013
      %v1016 = vmul.f32 %v666, %v1002
      %v1017 = vmul.f32 %v667, %v1002
      %v1018 = vmul.f32 %v668, %v1006
      %v1019 = vmul.f32 %v669, %v1006
      %v1020 = vmul.f32 %v670, %v1010
      %v1021 = vmul.f32 %v671, %v1010
      %v1022 = vmul.f32 %v672, %v1014
      %v1023 = vmul.f32 %v673, %v1014
      %v1024 = vadd.f32 %v992, %v1016
      %v1025 = vadd.f32 %v993, %v1017
      %v1026 = vadd.f32 %v994, %v1018
      %v1027 = vadd.f32 %v995, %v1019
      %v1028 = vadd.f32 %v996, %v1020
      %v1029 = vadd.f32 %v997, %v1021
      %v1030 = vadd.f32 %v998, %v1022
      %v1031 = vadd.f32 %v999, %v1023
      %1032 = vset.pattern.permute.xlu0 45
      %1033 = vperm.xlu0 %1032, %v206
      %v1034 = vpop.permute.xlu0 %1033
      %1036 = vset.pattern.permute.xlu0 45
      %1037 = vperm.xlu0 %1036, %v207
      %v1038 = vpop.permute.xlu0 %1037
      %1040 = vset.pattern.permute.xlu0 45
      %1041 = vperm.xlu0 %1040, %v208
      %v1042 = vpop.permute.xlu0 %1041
      %1044 = vset.pattern.permute.xlu0 45
      %1045 = vperm.xlu0 %1044, %v209
      %v1046 = vpop.permute.xlu0 %1045
      %v1048 = vmul.f32 %v756, %v1034
      %v1049 = vmul.f32 %v757, %v1034
      %v1050 = vmul.f32 %v758, %v1038
      %v1051 = vmul.f32 %v759, %v1038
      %v1052 = vmul.f32 %v760, %v1042
      %v1053 = vmul.f32 %v761, %v1042
      %v1054 = vmul.f32 %v762, %v1046
      %v1055 = vmul.f32 %v763, %v1046
      %v1056 = vadd.f32 %v1024, %v1048
      %v1057 = vadd.f32 %v1025, %v1049
      %v1058 = vadd.f32 %v1026, %v1050
      %v1059 = vadd.f32 %v1027, %v1051
      %v1060 = vadd.f32 %v1028, %v1052
      %v1061 = vadd.f32 %v1029, %v1053
      %v1062 = vadd.f32 %v1030, %v1054
      %v1063 = vadd.f32 %v1031, %v1055
      %1064 = vrot.lane.b32.xlu0 %v712, 112
      %v1065 = vpop.permute.xlu0 %1064
      %1066 = vrot.lane.b32.xlu0 %v714, 112
      %v1067 = vpop.permute.xlu0 %1066
      %1068 = vrot.lane.b32.xlu0 %v716, 112
      %v1069 = vpop.permute.xlu0 %1068
      %1070 = vrot.lane.b32.xlu0 %v718, 112
      %v1071 = vpop.permute.xlu0 %1070
      %1072 = vrot.lane.b32.xlu0 %v713, 112
      %v1073 = vpop.permute.xlu0 %1072
      %1074 = vrot.lane.b32.xlu0 %v715, 112
      %v1075 = vpop.permute.xlu0 %1074
      %1076 = vrot.lane.b32.xlu0 %v717, 112
      %v1077 = vpop.permute.xlu0 %1076
      %1078 = vrot.lane.b32.xlu0 %v719, 112
      %v1079 = vpop.permute.xlu0 %1078
      %vm1080 = vcmp.lt.s32.totalorder %v691, 112
      %v1081 = vsel %vm1080, %v1065, %v1073
      %v1082 = vsel %vm1080, %v1067, %v1075
      %v1083 = vsel %vm1080, %v1069, %v1077
      %v1084 = vsel %vm1080, %v1071, %v1079
      %v1085 = vsel %vm1080, %v1073, %v1065
      %v1086 = vsel %vm1080, %v1075, %v1067
      %v1087 = vsel %vm1080, %v1077, %v1069
      %v1088 = vsel %vm1080, %v1079, %v1071
      %v1090 = vlaneseq
      %v1091 = vshrl.u32 %v1090, 7
      %v1092 = vsub.s32 0, %v1091
      %v1093 = vrot.slane %v217, %v1092
      %v1094 = vlaneseq
      %v1095 = vshrl.u32 %v1094, 7
      %v1096 = vsub.s32 1, %v1095
      %v1097 = vrot.slane %v217, %v1096
      %v1100 = vmul.f32 %v1081, %v1093
      %v1101 = vmul.f32 %v1085, %v1097
      %v1102 = vmul.f32 %v1082, %v1093
      %v1103 = vmul.f32 %v1086, %v1097
      %v1104 = vmul.f32 %v1083, %v1093
      %v1105 = vmul.f32 %v1087, %v1097
      %v1106 = vmul.f32 %v1084, %v1093
      %v1107 = vmul.f32 %v1088, %v1097
      %1108 = vset.pattern.permute.xlu0 46
      %1109 = vperm.xlu0 %1108, %v206
      %v1110 = vpop.permute.xlu0 %1109
      %1112 = vset.pattern.permute.xlu0 46
      %1113 = vperm.xlu0 %1112, %v207
      %v1114 = vpop.permute.xlu0 %1113
      %1116 = vset.pattern.permute.xlu0 46
      %1117 = vperm.xlu0 %1116, %v208
      %v1118 = vpop.permute.xlu0 %1117
      %1120 = vset.pattern.permute.xlu0 46
      %1121 = vperm.xlu0 %1120, %v209
      %v1122 = vpop.permute.xlu0 %1121
      %v1124 = vmul.f32 %v1100, %v1110
      %v1125 = vmul.f32 %v1101, %v1110
      %v1126 = vmul.f32 %v1102, %v1114
      %v1127 = vmul.f32 %v1103, %v1114
      %v1128 = vmul.f32 %v1104, %v1118
      %v1129 = vmul.f32 %v1105, %v1118
      %v1130 = vmul.f32 %v1106, %v1122
      %v1131 = vmul.f32 %v1107, %v1122
      %v1132 = vadd.f32 %v1056, %v1124
      %v1133 = vadd.f32 %v1057, %v1125
      %v1134 = vadd.f32 %v1058, %v1126
      %v1135 = vadd.f32 %v1059, %v1127
      %v1136 = vadd.f32 %v1060, %v1128
      %v1137 = vadd.f32 %v1061, %v1129
      %v1138 = vadd.f32 %v1062, %v1130
      %v1139 = vadd.f32 %v1063, %v1131
      %1140 = vrot.lane.b32.xlu0 %v666, 112
      %v1141 = vpop.permute.xlu0 %1140
      %1142 = vrot.lane.b32.xlu0 %v668, 112
      %v1143 = vpop.permute.xlu0 %1142
      %1144 = vrot.lane.b32.xlu0 %v670, 112
      %v1145 = vpop.permute.xlu0 %1144
      %1146 = vrot.lane.b32.xlu0 %v672, 112
      %v1147 = vpop.permute.xlu0 %1146
      %1148 = vrot.lane.b32.xlu0 %v667, 112
      %v1149 = vpop.permute.xlu0 %1148
      %1150 = vrot.lane.b32.xlu0 %v669, 112
      %v1151 = vpop.permute.xlu0 %1150
      %1152 = vrot.lane.b32.xlu0 %v671, 112
      %v1153 = vpop.permute.xlu0 %1152
      %1154 = vrot.lane.b32.xlu0 %v673, 112
      %v1155 = vpop.permute.xlu0 %1154
      %v1156 = vsel %vm1080, %v1141, %v1149
      %v1157 = vsel %vm1080, %v1143, %v1151
      %v1158 = vsel %vm1080, %v1145, %v1153
      %v1159 = vsel %vm1080, %v1147, %v1155
      %v1160 = vsel %vm1080, %v1149, %v1141
      %v1161 = vsel %vm1080, %v1151, %v1143
      %v1162 = vsel %vm1080, %v1153, %v1145
      %v1163 = vsel %vm1080, %v1155, %v1147
      %v1164 = vmul.f32 %v1156, %v1093
      %v1165 = vmul.f32 %v1160, %v1097
      %v1166 = vmul.f32 %v1157, %v1093
      %v1167 = vmul.f32 %v1161, %v1097
      %v1168 = vmul.f32 %v1158, %v1093
      %v1169 = vmul.f32 %v1162, %v1097
      %v1170 = vmul.f32 %v1159, %v1093
      %v1171 = vmul.f32 %v1163, %v1097
      %1172 = vset.pattern.permute.xlu0 47
      %1173 = vperm.xlu0 %1172, %v206
      %v1174 = vpop.permute.xlu0 %1173
      %1176 = vset.pattern.permute.xlu0 47
      %1177 = vperm.xlu0 %1176, %v207
      %v1178 = vpop.permute.xlu0 %1177
      %1180 = vset.pattern.permute.xlu0 47
      %1181 = vperm.xlu0 %1180, %v208
      %v1182 = vpop.permute.xlu0 %1181
      %1184 = vset.pattern.permute.xlu0 47
      %1185 = vperm.xlu0 %1184, %v209
      %v1186 = vpop.permute.xlu0 %1185
      %v1188 = vmul.f32 %v1164, %v1174
      %v1189 = vmul.f32 %v1165, %v1174
      %v1190 = vmul.f32 %v1166, %v1178
      %v1191 = vmul.f32 %v1167, %v1178
      %v1192 = vmul.f32 %v1168, %v1182
      %v1193 = vmul.f32 %v1169, %v1182
      %v1194 = vmul.f32 %v1170, %v1186
      %v1195 = vmul.f32 %v1171, %v1186
      %v1196 = vadd.f32 %v1132, %v1188
      %v1197 = vadd.f32 %v1133, %v1189
      %v1198 = vadd.f32 %v1134, %v1190
      %v1199 = vadd.f32 %v1135, %v1191
      %v1200 = vadd.f32 %v1136, %v1192
      %v1201 = vadd.f32 %v1137, %v1193
      %v1202 = vadd.f32 %v1138, %v1194
      %v1203 = vadd.f32 %v1139, %v1195
      %1204 = vrot.lane.b32.xlu0 %v756, 112
      %v1205 = vpop.permute.xlu0 %1204
      %1206 = vrot.lane.b32.xlu0 %v758, 112
      %v1207 = vpop.permute.xlu0 %1206
      %1208 = vrot.lane.b32.xlu0 %v760, 112
      %v1209 = vpop.permute.xlu0 %1208
      %1210 = vrot.lane.b32.xlu0 %v762, 112
      %v1211 = vpop.permute.xlu0 %1210
      %1212 = vrot.lane.b32.xlu0 %v757, 112
      %v1213 = vpop.permute.xlu0 %1212
      %1214 = vrot.lane.b32.xlu0 %v759, 112
      %v1215 = vpop.permute.xlu0 %1214
      %1216 = vrot.lane.b32.xlu0 %v761, 112
      %v1217 = vpop.permute.xlu0 %1216
      %1218 = vrot.lane.b32.xlu0 %v763, 112
      %v1219 = vpop.permute.xlu0 %1218
      %v1220 = vsel %vm1080, %v1205, %v1213
      %v1221 = vsel %vm1080, %v1207, %v1215
      %v1222 = vsel %vm1080, %v1209, %v1217
      %v1223 = vsel %vm1080, %v1211, %v1219
      %v1224 = vsel %vm1080, %v1213, %v1205
      %v1225 = vsel %vm1080, %v1215, %v1207
      %v1226 = vsel %vm1080, %v1217, %v1209
      %v1227 = vsel %vm1080, %v1219, %v1211
      %v1228 = vmul.f32 %v1220, %v1093
      %v1229 = vmul.f32 %v1224, %v1097
      %v1230 = vmul.f32 %v1221, %v1093
      %v1231 = vmul.f32 %v1225, %v1097
      %v1232 = vmul.f32 %v1222, %v1093
      %v1233 = vmul.f32 %v1226, %v1097
      %v1234 = vmul.f32 %v1223, %v1093
      %v1235 = vmul.f32 %v1227, %v1097
      %1236 = vset.pattern.permute.xlu0 48
      %1237 = vperm.xlu0 %1236, %v206
      %v1238 = vpop.permute.xlu0 %1237
      %1240 = vset.pattern.permute.xlu0 48
      %1241 = vperm.xlu0 %1240, %v207
      %v1242 = vpop.permute.xlu0 %1241
      %1244 = vset.pattern.permute.xlu0 48
      %1245 = vperm.xlu0 %1244, %v208
      %v1246 = vpop.permute.xlu0 %1245
      %1248 = vset.pattern.permute.xlu0 48
      %1249 = vperm.xlu0 %1248, %v209
      %v1250 = vpop.permute.xlu0 %1249
      %v1252 = vmul.f32 %v1228, %v1238
      %v1253 = vmul.f32 %v1229, %v1238
      %v1254 = vmul.f32 %v1230, %v1242
      %v1255 = vmul.f32 %v1231, %v1242
      %v1256 = vmul.f32 %v1232, %v1246
      %v1257 = vmul.f32 %v1233, %v1246
      %v1258 = vmul.f32 %v1234, %v1250
      %v1259 = vmul.f32 %v1235, %v1250
      %v1260 = vadd.f32 %v1196, %v1252
      %v1261 = vadd.f32 %v1197, %v1253
      %v1262 = vadd.f32 %v1198, %v1254
      %v1263 = vadd.f32 %v1199, %v1255
      %v1264 = vadd.f32 %v1200, %v1256
      %v1265 = vadd.f32 %v1201, %v1257
      %v1266 = vadd.f32 %v1202, %v1258
      %v1267 = vadd.f32 %v1203, %v1259
      %1268 = vset.pattern.permute.xlu0 57
      %1269 = vperm.xlu0 %1268, %v206
      %v1270 = vpop.permute.xlu0 %1269
      %1272 = vset.pattern.permute.xlu0 57
      %1273 = vperm.xlu0 %1272, %v207
      %v1274 = vpop.permute.xlu0 %1273
      %1276 = vset.pattern.permute.xlu0 57
      %1277 = vperm.xlu0 %1276, %v208
      %v1278 = vpop.permute.xlu0 %1277
      %1280 = vset.pattern.permute.xlu0 57
      %1281 = vperm.xlu0 %1280, %v209
      %v1282 = vpop.permute.xlu0 %1281
      %v1284 = vadd.f32 %v1260, %v1270
      %v1285 = vadd.f32 %v1261, %v1270
      %v1286 = vadd.f32 %v1262, %v1274
      %v1287 = vadd.f32 %v1263, %v1274
      %v1288 = vadd.f32 %v1264, %v1278
      %v1289 = vadd.f32 %v1265, %v1278
      %v1290 = vadd.f32 %v1266, %v1282
      %v1291 = vadd.f32 %v1267, %v1282
      %1292 = vrot.lane.b32.xlu0 %v1284, 1
      %v1293 = vpop.permute.xlu0 %1292
      %1294 = vrot.lane.b32.xlu0 %v1286, 1
      %v1295 = vpop.permute.xlu0 %1294
      %1296 = vrot.lane.b32.xlu0 %v1288, 1
      %v1297 = vpop.permute.xlu0 %1296
      %1298 = vrot.lane.b32.xlu0 %v1290, 1
      %v1299 = vpop.permute.xlu0 %1298
      %1300 = vrot.lane.b32.xlu0 %v1285, 1
      %v1301 = vpop.permute.xlu0 %1300
      %1302 = vrot.lane.b32.xlu0 %v1287, 1
      %v1303 = vpop.permute.xlu0 %1302
      %1304 = vrot.lane.b32.xlu0 %v1289, 1
      %v1305 = vpop.permute.xlu0 %1304
      %1306 = vrot.lane.b32.xlu0 %v1291, 1
      %v1307 = vpop.permute.xlu0 %1306
      %v1308 = vsel %vm692, %v1293, %v1301
      %v1309 = vsel %vm692, %v1295, %v1303
      %v1310 = vsel %vm692, %v1297, %v1305
      %v1311 = vsel %vm692, %v1299, %v1307
      %v1312 = vsel %vm692, %v1301, %v1293
      %v1313 = vsel %vm692, %v1303, %v1295
      %v1314 = vsel %vm692, %v1305, %v1297
      %v1315 = vsel %vm692, %v1307, %v1299
      %v1316 = vmul.f32 %v705, %v1312
      %v1317 = vmul.f32 %v709, %v1308
      %v1318 = vmul.f32 %v705, %v1313
      %v1319 = vmul.f32 %v709, %v1309
      %v1320 = vmul.f32 %v705, %v1314
      %v1321 = vmul.f32 %v709, %v1310
      %v1322 = vmul.f32 %v705, %v1315
      %v1323 = vmul.f32 %v709, %v1311
      %1324 = vrot.lane.b32.xlu0 %v1284, 127
      %v1325 = vpop.permute.xlu0 %1324
      %1326 = vrot.lane.b32.xlu0 %v1286, 127
      %v1327 = vpop.permute.xlu0 %1326
      %1328 = vrot.lane.b32.xlu0 %v1288, 127
      %v1329 = vpop.permute.xlu0 %1328
      %1330 = vrot.lane.b32.xlu0 %v1290, 127
      %v1331 = vpop.permute.xlu0 %1330
      %1332 = vrot.lane.b32.xlu0 %v1285, 127
      %v1333 = vpop.permute.xlu0 %1332
      %1334 = vrot.lane.b32.xlu0 %v1287, 127
      %v1335 = vpop.permute.xlu0 %1334
      %1336 = vrot.lane.b32.xlu0 %v1289, 127
      %v1337 = vpop.permute.xlu0 %1336
      %1338 = vrot.lane.b32.xlu0 %v1291, 127
      %v1339 = vpop.permute.xlu0 %1338
      %v1340 = vsel %vm736, %v1325, %v1333
      %v1341 = vsel %vm736, %v1327, %v1335
      %v1342 = vsel %vm736, %v1329, %v1337
      %v1343 = vsel %vm736, %v1331, %v1339
      %v1344 = vsel %vm736, %v1333, %v1325
      %v1345 = vsel %vm736, %v1335, %v1327
      %v1346 = vsel %vm736, %v1337, %v1329
      %v1347 = vsel %vm736, %v1339, %v1331
      %v1348 = vmul.f32 %v749, %v1340
      %v1349 = vmul.f32 %v753, %v1344
      %v1350 = vmul.f32 %v749, %v1341
      %v1351 = vmul.f32 %v753, %v1345
      %v1352 = vmul.f32 %v749, %v1342
      %v1353 = vmul.f32 %v753, %v1346
      %v1354 = vmul.f32 %v749, %v1343
      %v1355 = vmul.f32 %v753, %v1347
      %1356 = vset.pattern.permute.xlu0 49
      %1357 = vperm.xlu0 %1356, %v206
      %v1358 = vpop.permute.xlu0 %1357
      %1360 = vset.pattern.permute.xlu0 49
      %1361 = vperm.xlu0 %1360, %v207
      %v1362 = vpop.permute.xlu0 %1361
      %1364 = vset.pattern.permute.xlu0 49
      %1365 = vperm.xlu0 %1364, %v208
      %v1366 = vpop.permute.xlu0 %1365
      %1368 = vset.pattern.permute.xlu0 49
      %1369 = vperm.xlu0 %1368, %v209
      %v1370 = vpop.permute.xlu0 %1369
      %v1372 = vmul.f32 %v1316, %v1358
      %v1373 = vmul.f32 %v1317, %v1358
      %v1374 = vmul.f32 %v1318, %v1362
      %v1375 = vmul.f32 %v1319, %v1362
      %v1376 = vmul.f32 %v1320, %v1366
      %v1377 = vmul.f32 %v1321, %v1366
      %v1378 = vmul.f32 %v1322, %v1370
      %v1379 = vmul.f32 %v1323, %v1370
      %1380 = vset.pattern.permute.xlu0 50
      %1381 = vperm.xlu0 %1380, %v206
      %v1382 = vpop.permute.xlu0 %1381
      %1384 = vset.pattern.permute.xlu0 50
      %1385 = vperm.xlu0 %1384, %v207
      %v1386 = vpop.permute.xlu0 %1385
      %1388 = vset.pattern.permute.xlu0 50
      %1389 = vperm.xlu0 %1388, %v208
      %v1390 = vpop.permute.xlu0 %1389
      %1392 = vset.pattern.permute.xlu0 50
      %1393 = vperm.xlu0 %1392, %v209
      %v1394 = vpop.permute.xlu0 %1393
      %v1396 = vmul.f32 %v1284, %v1382
      %v1397 = vmul.f32 %v1285, %v1382
      %v1398 = vmul.f32 %v1286, %v1386
      %v1399 = vmul.f32 %v1287, %v1386
      %v1400 = vmul.f32 %v1288, %v1390
      %v1401 = vmul.f32 %v1289, %v1390
      %v1402 = vmul.f32 %v1290, %v1394
      %v1403 = vmul.f32 %v1291, %v1394
      %v1404 = vadd.f32 %v1372, %v1396
      %v1405 = vadd.f32 %v1373, %v1397
      %v1406 = vadd.f32 %v1374, %v1398
      %v1407 = vadd.f32 %v1375, %v1399
      %v1408 = vadd.f32 %v1376, %v1400
      %v1409 = vadd.f32 %v1377, %v1401
      %v1410 = vadd.f32 %v1378, %v1402
      %v1411 = vadd.f32 %v1379, %v1403
      %1412 = vset.pattern.permute.xlu0 51
      %1413 = vperm.xlu0 %1412, %v206
      %v1414 = vpop.permute.xlu0 %1413
      %1416 = vset.pattern.permute.xlu0 51
      %1417 = vperm.xlu0 %1416, %v207
      %v1418 = vpop.permute.xlu0 %1417
      %1420 = vset.pattern.permute.xlu0 51
      %1421 = vperm.xlu0 %1420, %v208
      %v1422 = vpop.permute.xlu0 %1421
      %1424 = vset.pattern.permute.xlu0 51
      %1425 = vperm.xlu0 %1424, %v209
      %v1426 = vpop.permute.xlu0 %1425
      %v1428 = vmul.f32 %v1348, %v1414
      %v1429 = vmul.f32 %v1349, %v1414
      %v1430 = vmul.f32 %v1350, %v1418
      %v1431 = vmul.f32 %v1351, %v1418
      %v1432 = vmul.f32 %v1352, %v1422
      %v1433 = vmul.f32 %v1353, %v1422
      %v1434 = vmul.f32 %v1354, %v1426
      %v1435 = vmul.f32 %v1355, %v1426
      %v1436 = vadd.f32 %v1404, %v1428
      %v1437 = vadd.f32 %v1405, %v1429
      %v1438 = vadd.f32 %v1406, %v1430
      %v1439 = vadd.f32 %v1407, %v1431
      %v1440 = vadd.f32 %v1408, %v1432
      %v1441 = vadd.f32 %v1409, %v1433
      %v1442 = vadd.f32 %v1410, %v1434
      %v1443 = vadd.f32 %v1411, %v1435
      %1444 = vset.pattern.permute.xlu0 58
      %1445 = vperm.xlu0 %1444, %v206
      %v1446 = vpop.permute.xlu0 %1445
      %1448 = vset.pattern.permute.xlu0 58
      %1449 = vperm.xlu0 %1448, %v207
      %v1450 = vpop.permute.xlu0 %1449
      %1452 = vset.pattern.permute.xlu0 58
      %1453 = vperm.xlu0 %1452, %v208
      %v1454 = vpop.permute.xlu0 %1453
      %1456 = vset.pattern.permute.xlu0 58
      %1457 = vperm.xlu0 %1456, %v209
      %v1458 = vpop.permute.xlu0 %1457
      %v1460 = vadd.f32 %v1436, %v1446
      %v1461 = vadd.f32 %v1437, %v1446
      %v1462 = vadd.f32 %v1438, %v1450
      %v1463 = vadd.f32 %v1439, %v1450
      %v1464 = vadd.f32 %v1440, %v1454
      %v1465 = vadd.f32 %v1441, %v1454
      %v1466 = vadd.f32 %v1442, %v1458
      %v1467 = vadd.f32 %v1443, %v1458
      %1468 = vrot.lane.b32.xlu0 %v1460, 16
      %v1469 = vpop.permute.xlu0 %1468
      %1470 = vrot.lane.b32.xlu0 %v1462, 16
      %v1471 = vpop.permute.xlu0 %1470
      %1472 = vrot.lane.b32.xlu0 %v1464, 16
      %v1473 = vpop.permute.xlu0 %1472
      %1474 = vrot.lane.b32.xlu0 %v1466, 16
      %v1475 = vpop.permute.xlu0 %1474
      %1476 = vrot.lane.b32.xlu0 %v1461, 16
      %v1477 = vpop.permute.xlu0 %1476
      %1478 = vrot.lane.b32.xlu0 %v1463, 16
      %v1479 = vpop.permute.xlu0 %1478
      %1480 = vrot.lane.b32.xlu0 %v1465, 16
      %v1481 = vpop.permute.xlu0 %1480
      %1482 = vrot.lane.b32.xlu0 %v1467, 16
      %v1483 = vpop.permute.xlu0 %1482
      %v1484 = vsel %vm780, %v1469, %v1477
      %v1485 = vsel %vm780, %v1471, %v1479
      %v1486 = vsel %vm780, %v1473, %v1481
      %v1487 = vsel %vm780, %v1475, %v1483
      %v1488 = vsel %vm780, %v1477, %v1469
      %v1489 = vsel %vm780, %v1479, %v1471
      %v1490 = vsel %vm780, %v1481, %v1473
      %v1491 = vsel %vm780, %v1483, %v1475
      %v1492 = vmul.f32 %v1488, %v793
      %v1493 = vmul.f32 %v1484, %v797
      %v1494 = vmul.f32 %v1489, %v793
      %v1495 = vmul.f32 %v1485, %v797
      %v1496 = vmul.f32 %v1490, %v793
      %v1497 = vmul.f32 %v1486, %v797
      %v1498 = vmul.f32 %v1491, %v793
      %v1499 = vmul.f32 %v1487, %v797
      %1500 = vset.pattern.permute.xlu0 52
      %1501 = vperm.xlu0 %1500, %v206
      %v1502 = vpop.permute.xlu0 %1501
      %1504 = vset.pattern.permute.xlu0 52
      %1505 = vperm.xlu0 %1504, %v207
      %v1506 = vpop.permute.xlu0 %1505
      %1508 = vset.pattern.permute.xlu0 52
      %1509 = vperm.xlu0 %1508, %v208
      %v1510 = vpop.permute.xlu0 %1509
      %1512 = vset.pattern.permute.xlu0 52
      %1513 = vperm.xlu0 %1512, %v209
      %v1514 = vpop.permute.xlu0 %1513
      %v1516 = vmul.f32 %v1492, %v1502
      %v1517 = vmul.f32 %v1493, %v1502
      %v1518 = vmul.f32 %v1494, %v1506
      %v1519 = vmul.f32 %v1495, %v1506
      %v1520 = vmul.f32 %v1496, %v1510
      %v1521 = vmul.f32 %v1497, %v1510
      %v1522 = vmul.f32 %v1498, %v1514
      %v1523 = vmul.f32 %v1499, %v1514
      %1524 = vset.pattern.permute.xlu0 53
      %1525 = vperm.xlu0 %1524, %v206
      %v1526 = vpop.permute.xlu0 %1525
      %1528 = vset.pattern.permute.xlu0 53
      %1529 = vperm.xlu0 %1528, %v207
      %v1530 = vpop.permute.xlu0 %1529
      %1532 = vset.pattern.permute.xlu0 53
      %1533 = vperm.xlu0 %1532, %v208
      %v1534 = vpop.permute.xlu0 %1533
      %1536 = vset.pattern.permute.xlu0 53
      %1537 = vperm.xlu0 %1536, %v209
      %v1538 = vpop.permute.xlu0 %1537
      %v1540 = vmul.f32 %v1460, %v1526
      %v1541 = vmul.f32 %v1461, %v1526
      %v1542 = vmul.f32 %v1462, %v1530
      %v1543 = vmul.f32 %v1463, %v1530
      %v1544 = vmul.f32 %v1464, %v1534
      %v1545 = vmul.f32 %v1465, %v1534
      %v1546 = vmul.f32 %v1466, %v1538
      %v1547 = vmul.f32 %v1467, %v1538
      %v1548 = vadd.f32 %v1516, %v1540
      %v1549 = vadd.f32 %v1517, %v1541
      %v1550 = vadd.f32 %v1518, %v1542
      %v1551 = vadd.f32 %v1519, %v1543
      %v1552 = vadd.f32 %v1520, %v1544
      %v1553 = vadd.f32 %v1521, %v1545
      %v1554 = vadd.f32 %v1522, %v1546
      %v1555 = vadd.f32 %v1523, %v1547
      %1556 = vrot.lane.b32.xlu0 %v1460, 112
      %v1557 = vpop.permute.xlu0 %1556
      %1558 = vrot.lane.b32.xlu0 %v1462, 112
      %v1559 = vpop.permute.xlu0 %1558
      %1560 = vrot.lane.b32.xlu0 %v1464, 112
      %v1561 = vpop.permute.xlu0 %1560
      %1562 = vrot.lane.b32.xlu0 %v1466, 112
      %v1563 = vpop.permute.xlu0 %1562
      %1564 = vrot.lane.b32.xlu0 %v1461, 112
      %v1565 = vpop.permute.xlu0 %1564
      %1566 = vrot.lane.b32.xlu0 %v1463, 112
      %v1567 = vpop.permute.xlu0 %1566
      %1568 = vrot.lane.b32.xlu0 %v1465, 112
      %v1569 = vpop.permute.xlu0 %1568
      %1570 = vrot.lane.b32.xlu0 %v1467, 112
      %v1571 = vpop.permute.xlu0 %1570
      %v1572 = vsel %vm1080, %v1557, %v1565
      %v1573 = vsel %vm1080, %v1559, %v1567
      %v1574 = vsel %vm1080, %v1561, %v1569
      %v1575 = vsel %vm1080, %v1563, %v1571
      %v1576 = vsel %vm1080, %v1565, %v1557
      %v1577 = vsel %vm1080, %v1567, %v1559
      %v1578 = vsel %vm1080, %v1569, %v1561
      %v1579 = vsel %vm1080, %v1571, %v1563
      %v1580 = vmul.f32 %v1572, %v1093
      %v1581 = vmul.f32 %v1576, %v1097
      %v1582 = vmul.f32 %v1573, %v1093
      %v1583 = vmul.f32 %v1577, %v1097
      %v1584 = vmul.f32 %v1574, %v1093
      %v1585 = vmul.f32 %v1578, %v1097
      %v1586 = vmul.f32 %v1575, %v1093
      %v1587 = vmul.f32 %v1579, %v1097
      %1588 = vset.pattern.permute.xlu0 54
      %1589 = vperm.xlu0 %1588, %v206
      %v1590 = vpop.permute.xlu0 %1589
      %1592 = vset.pattern.permute.xlu0 54
      %1593 = vperm.xlu0 %1592, %v207
      %v1594 = vpop.permute.xlu0 %1593
      %1596 = vset.pattern.permute.xlu0 54
      %1597 = vperm.xlu0 %1596, %v208
      %v1598 = vpop.permute.xlu0 %1597
      %1600 = vset.pattern.permute.xlu0 54
      %1601 = vperm.xlu0 %1600, %v209
      %v1602 = vpop.permute.xlu0 %1601
      %v1604 = vmul.f32 %v1580, %v1590
      %v1605 = vmul.f32 %v1581, %v1590
      %v1606 = vmul.f32 %v1582, %v1594
      %v1607 = vmul.f32 %v1583, %v1594
      %v1608 = vmul.f32 %v1584, %v1598
      %v1609 = vmul.f32 %v1585, %v1598
      %v1610 = vmul.f32 %v1586, %v1602
      %v1611 = vmul.f32 %v1587, %v1602
      %v1612 = vadd.f32 %v1548, %v1604
      %v1613 = vadd.f32 %v1549, %v1605
      %v1614 = vadd.f32 %v1550, %v1606
      %v1615 = vadd.f32 %v1551, %v1607
      %v1616 = vadd.f32 %v1552, %v1608
      %v1617 = vadd.f32 %v1553, %v1609
      %v1618 = vadd.f32 %v1554, %v1610
      %v1619 = vadd.f32 %v1555, %v1611
      %1620 = vset.pattern.permute.xlu0 59
      %1621 = vperm.xlu0 %1620, %v206
      %v1622 = vpop.permute.xlu0 %1621
      %1624 = vset.pattern.permute.xlu0 59
      %1625 = vperm.xlu0 %1624, %v207
      %v1626 = vpop.permute.xlu0 %1625
      %1628 = vset.pattern.permute.xlu0 59
      %1629 = vperm.xlu0 %1628, %v208
      %v1630 = vpop.permute.xlu0 %1629
      %1632 = vset.pattern.permute.xlu0 59
      %1633 = vperm.xlu0 %1632, %v209
      %v1634 = vpop.permute.xlu0 %1633
      %v1636 = vadd.f32 %v1612, %v1622
      %v1637 = vadd.f32 %v1613, %v1622
      %v1638 = vadd.f32 %v1614, %v1626
      %v1639 = vadd.f32 %v1615, %v1626
      %v1640 = vadd.f32 %v1616, %v1630
      %v1641 = vadd.f32 %v1617, %v1630
      %v1642 = vadd.f32 %v1618, %v1634
      %v1643 = vadd.f32 %v1619, %v1634
      %v1644 = vadd.f32 %v1636, %v1284
      %v1645 = vadd.f32 %v1637, %v1285
      %v1646 = vadd.f32 %v1638, %v1286
      %v1647 = vadd.f32 %v1639, %v1287
      %v1648 = vadd.f32 %v1640, %v1288
      %v1649 = vadd.f32 %v1641, %v1289
      %v1650 = vadd.f32 %v1642, %v1290
      %v1651 = vadd.f32 %v1643, %v1291
      %1652 = vmatprep.subr.mxu0 %v1645
      %1653 = vmatpush1.msra.mxu0 %v1644
      %1654 = vmatprep.subr.mxu0 %v1647
      %1655 = vmatpush1.msra.mxu0 %v1646
      %1656 = vmatprep.subr.mxu0 %v1649
      %1657 = vmatpush1.msra.mxu0 %v1648
      %1658 = vmatprep.subr.mxu0 %v1651
      %1659 = vmatpush1.msra.mxu0 %v1650
      %1660 = vmatprep.subr.mxu0 0.0
      %1661 = vmatpush1.msra.mxu0 0.0
      %1662 = vmatprep.subr.mxu0 0.0
      %1663 = vmatpush1.msra.mxu0 0.0
      %1664 = vmatprep.subr.mxu0 0.0
      %1665 = vmatpush1.msra.mxu0 0.0
      %1666 = vmatprep.subr.mxu0 0.0
      %1667 = vmatpush1.msra.mxu0 0.0
      %1668 = vmatprep.subr.mxu0 0.0
      %1669 = vmatpush1.msra.mxu0 0.0
      %1670 = vmatprep.subr.mxu0 0.0
      %1671 = vmatpush1.msra.mxu0 0.0
      %1672 = vmatprep.subr.mxu0 0.0
      %1673 = vmatpush1.msra.mxu0 0.0
      %1674 = vmatprep.subr.mxu0 0.0
      %1675 = vmatpush1.msra.mxu0 0.0
      %1676 = vmatprep.subr.mxu0 0.0
      %1677 = vmatpush1.msra.mxu0 0.0
      %1678 = vmatprep.subr.mxu0 0.0
      %1679 = vmatpush1.msra.mxu0 0.0
      %1680 = vmatprep.subr.mxu0 0.0
      %1681 = vmatpush1.msra.mxu0 0.0
      %1682 = vmatprep.subr.mxu0 0.0
      %1683 = vmatpush1.msra.mxu0 0.0
      %1684 = vmatprep.subr.mxu0 0.0
      %1685 = vmatpush1.msra.mxu0 0.0
      %1686 = vmatprep.subr.mxu0 0.0
      %1687 = vmatpush1.msra.mxu0 0.0
      %1688 = vmatprep.subr.mxu0 0.0
      %1689 = vmatpush1.msra.mxu0 0.0
      %1690 = vmatprep.subr.mxu0 0.0
      %1691 = vmatpush1.msra.mxu0 0.0
      %1692 = vmatprep.subr.mxu0 0.0
      %1693 = vmatpush1.msra.mxu0 0.0
      %1694 = vmatprep.subr.mxu0 0.0
      %1695 = vmatpush1.msra.mxu0 0.0
      %1696 = vmatprep.subr.mxu0 0.0
      %1697 = vmatpush1.msra.mxu0 0.0
      %1698 = vmatprep.subr.mxu0 0.0
      %1699 = vmatpush1.msra.mxu0 0.0
      %1700 = vmatprep.subr.mxu0 0.0
      %1701 = vmatpush1.msra.mxu0 0.0
      %1702 = vmatprep.subr.mxu0 0.0
      %1703 = vmatpush1.msra.mxu0 0.0
      %1704 = vmatprep.subr.mxu0 0.0
      %1705 = vmatpush1.msra.mxu0 0.0
      %1706 = vmatprep.subr.mxu0 0.0
      %1707 = vmatpush1.msra.mxu0 0.0
      %1708 = vmatprep.subr.mxu0 0.0
      %1709 = vmatpush1.msra.mxu0 0.0
      %1710 = vmatprep.subr.mxu0 0.0
      %1711 = vmatpush1.msra.mxu0 0.0
      %1712 = vmatprep.subr.mxu0 0.0
      %1713 = vmatpush1.msra.mxu0 0.0
      %1714 = vmatprep.subr.mxu0 0.0
      %1715 = vmatpush1.msra.mxu0 0.0
      %1716 = vmatprep.mubr.f32.mxu0 0.0
      %1717 = vmatmul.mubr.f32.gmra.mrb[0].mxu0 %v239
      %v1718 = vpop.f32.mrb[0].mxu0
      %v1719 = vadd.f32 %v221, %v1718
      %v1720 = vpop.f32.mrb[0].mxu0
      %v1721 = vadd.f32 %v221, %v1720
      %1722 = vmatprep.mubr.f32.mxu0 0.0
      %1723 = vmatmul.mubr.f32.gmra.mrb[0].mxu0 %v241
      %v1724 = vpop.f32.mrb[0].mxu0
      %v1725 = vadd.f32 %v226, %v1724
      %v1726 = vpop.f32.mrb[0].mxu0
      %v1727 = vadd.f32 %v226, %v1726
      %1728 = vmatprep.mubr.f32.mxu0 0.0
      %1729 = vmatmul.mubr.f32.gmra.mrb[0].mxu0 %v243
      %v1730 = vpop.f32.mrb[0].mxu0
      %v1731 = vadd.f32 %v231, %v1730
      %v1732 = vpop.f32.mrb[0].mxu0
      %v1733 = vadd.f32 %v231, %v1732
      %1734 = vmatprep.mubr.f32.mxu0 0.0
      %1735 = vmatmul.mubr.f32.gmra.mrb[0].mxu0 %v245
      %v1736 = vpop.f32.mrb[0].mxu0
      %v1737 = vadd.f32 %v236, %v1736
      %v1738 = vpop.f32.mrb[0].mxu0
      %v1739 = vadd.f32 %v236, %v1738
      %1740 = vdwg.mxu0
      %v1741 = vmul.f32 %v1719, %v666
      %v1742 = vmul.f32 %v1721, %v667
      %v1743 = vmul.f32 %v1725, %v668
      %v1744 = vmul.f32 %v1727, %v669
      %v1745 = vmul.f32 %v1731, %v670
      %v1746 = vmul.f32 %v1733, %v671
      %v1747 = vmul.f32 %v1737, %v672
      %v1748 = vmul.f32 %v1739, %v673
      %1749 = vmatprep.subr.mxu0 %v1742
      %1750 = vmatpush1.msra.mxu0 %v1741
      %1751 = vmatprep.subr.mxu0 %v1744
      %1752 = vmatpush1.msra.mxu0 %v1743
      %1753 = vmatprep.subr.mxu0 %v1746
      %1754 = vmatpush1.msra.mxu0 %v1745
      %1755 = vmatprep.subr.mxu0 %v1748
      %1756 = vmatpush1.msra.mxu0 %v1747
      %1757 = vmatprep.subr.mxu0 0.0
      %1758 = vmatpush1.msra.mxu0 0.0
      %1759 = vmatprep.subr.mxu0 0.0
      %1760 = vmatpush1.msra.mxu0 0.0
      %1761 = vmatprep.subr.mxu0 0.0
      %1762 = vmatpush1.msra.mxu0 0.0
      %1763 = vmatprep.subr.mxu0 0.0
      %1764 = vmatpush1.msra.mxu0 0.0
      %1765 = vmatprep.subr.mxu0 0.0
      %1766 = vmatpush1.msra.mxu0 0.0
      %1767 = vmatprep.subr.mxu0 0.0
      %1768 = vmatpush1.msra.mxu0 0.0
      %1769 = vmatprep.subr.mxu0 0.0
      %1770 = vmatpush1.msra.mxu0 0.0
      %1771 = vmatprep.subr.mxu0 0.0
      %1772 = vmatpush1.msra.mxu0 0.0
      %1773 = vmatprep.subr.mxu0 0.0
      %1774 = vmatpush1.msra.mxu0 0.0
      %1775 = vmatprep.subr.mxu0 0.0
      %1776 = vmatpush1.msra.mxu0 0.0
      %1777 = vmatprep.subr.mxu0 0.0
      %1778 = vmatpush1.msra.mxu0 0.0
      %1779 = vmatprep.subr.mxu0 0.0
      %1780 = vmatpush1.msra.mxu0 0.0
      %1781 = vmatprep.subr.mxu0 0.0
      %1782 = vmatpush1.msra.mxu0 0.0
      %1783 = vmatprep.subr.mxu0 0.0
      %1784 = vmatpush1.msra.mxu0 0.0
      %1785 = vmatprep.subr.mxu0 0.0
      %1786 = vmatpush1.msra.mxu0 0.0
      %1787 = vmatprep.subr.mxu0 0.0
      %1788 = vmatpush1.msra.mxu0 0.0
      %1789 = vmatprep.subr.mxu0 0.0
      %1790 = vmatpush1.msra.mxu0 0.0
      %1791 = vmatprep.subr.mxu0 0.0
      %1792 = vmatpush1.msra.mxu0 0.0
      %1793 = vmatprep.subr.mxu0 0.0
      %1794 = vmatpush1.msra.mxu0 0.0
      %1795 = vmatprep.subr.mxu0 0.0
      %1796 = vmatpush1.msra.mxu0 0.0
      %1797 = vmatprep.subr.mxu0 0.0
      %1798 = vmatpush1.msra.mxu0 0.0
      %1799 = vmatprep.subr.mxu0 0.0
      %1800 = vmatpush1.msra.mxu0 0.0
      %1801 = vmatprep.subr.mxu0 0.0
      %1802 = vmatpush1.msra.mxu0 0.0
      %1803 = vmatprep.subr.mxu0 0.0
      %1804 = vmatpush1.msra.mxu0 0.0
      %1805 = vmatprep.subr.mxu0 0.0
      %1806 = vmatpush1.msra.mxu0 0.0
      %1807 = vmatprep.subr.mxu0 0.0
      %1808 = vmatpush1.msra.mxu0 0.0
      %1809 = vmatprep.subr.mxu0 0.0
      %1810 = vmatpush1.msra.mxu0 0.0
      %1811 = vmatprep.subr.mxu0 0.0
      %1812 = vmatpush1.msra.mxu0 0.0
      %1813 = vmatprep.mubr.f32.mxu0 0.0
      %1814 = vmatmul.mubr.f32.gmra.mrb[0].mxu0 %v239
      %v1815 = vpop.f32.mrb[0].mxu0
      %v1816 = vadd.f32 %v221, %v1815
      %v1817 = vpop.f32.mrb[0].mxu0
      %v1818 = vadd.f32 %v221, %v1817
      %1819 = vmatprep.mubr.f32.mxu0 0.0
      %1820 = vmatmul.mubr.f32.gmra.mrb[0].mxu0 %v241
      %v1821 = vpop.f32.mrb[0].mxu0
      %v1822 = vadd.f32 %v226, %v1821
      %v1823 = vpop.f32.mrb[0].mxu0
      %v1824 = vadd.f32 %v226, %v1823
      %1825 = vmatprep.mubr.f32.mxu0 0.0
      %1826 = vmatmul.mubr.f32.gmra.mrb[0].mxu0 %v243
      %v1827 = vpop.f32.mrb[0].mxu0
      %v1828 = vadd.f32 %v231, %v1827
      %v1829 = vpop.f32.mrb[0].mxu0
      %v1830 = vadd.f32 %v231, %v1829
      %1831 = vmatprep.mubr.f32.mxu0 0.0
      %1832 = vmatmul.mubr.f32.gmra.mrb[0].mxu0 %v245
      %v1833 = vpop.f32.mrb[0].mxu0
      %v1834 = vadd.f32 %v236, %v1833
      %v1835 = vpop.f32.mrb[0].mxu0
      %v1836 = vadd.f32 %v236, %v1835
      %1837 = vdwg.mxu0
      %1838 = vst [vmem:[%s197] sm:$0xff] %v1816
      %1839 = vst [vmem:[%s197 + $0x8] sm:$0xff] %v1818
      %1840 = vst [vmem:[%s197 + $0x10] sm:$0xff] %v1822
      %1841 = vst [vmem:[%s197 + $0x18] sm:$0xff] %v1824
      %1842 = vst [vmem:[%s197 + $0x20] sm:$0xff] %v1828
      %1843 = vst [vmem:[%s197 + $0x28] sm:$0xff] %v1830
      %1844 = vst [vmem:[%s197 + $0x30] sm:$0xff] %v1834
      %1845 = vst [vmem:[%s197 + $0x38] sm:$0xff] %v1836
      %p1846 = scmp.lt.s32.totalorder %s15, 1
      %s1847 = scalar_select %p1846, %s15, 1
      %s1848 = smul.addr %s1847, 8
      %s1849 = smul.addr %s1848, 8
      %s1850 = scalar_lea.vmem %s4, %s1849
      // Predicated region
      $region37: #{cdca_forward_pallas.1} parent=35 // pred_check
        %p1851 = pneg %p122
      $region38: #{cdca_forward_pallas.1} parent=35 // pred_check_branch
        %1853 = sbr.rel (%p1851) target = $region40
      $region39: #{cdca_forward_pallas.1} parent=35 // pred_region
        _
      $region40: #{cdca_forward_pallas.1} parent=35 // pred_fallthru
        _
    $region36: #{cdca_forward_pallas.1} parent=5 // pred_fallthru
      _
    %p1854 = scmp.le.s32.totalorder 2, %s10
    // Predicated region
    $region41: #{cdca_forward_pallas.1} parent=5 // pred_check
      %p1855 = pneg %p1854
    $region42: #{cdca_forward_pallas.1} parent=5 // pred_check_branch
      %1857 = sbr.rel (%p1855) target = $region44
    $region43: #{cdca_forward_pallas.1} parent=5 // pred_region
      %s1858 = ssub.s32 %s10, 2
      // Predicated region
      $region45: #{cdca_forward_pallas.1} parent=43 // pred_check
        %p1859 = pneg %p128
      $region46: #{cdca_forward_pallas.1} parent=43 // pred_check_branch
        %1861 = sbr.rel (%p1859) target = $region48
      $region47: #{cdca_forward_pallas.1} parent=43 // pred_region
        %p1862 = scmp.lt.s32.totalorder %s16, 1
        %s1863 = scalar_select %p1862, %s16, 1
        %s1864 = smul.addr %s1863, 8
        %s1865 = smul.addr %s1864, 8
        %s1866 = scalar_lea.vmem %s4, %s1865
      $region48: #{cdca_forward_pallas.1} parent=43 // pred_fallthru
        _
    $region44: #{cdca_forward_pallas.1} parent=5 // pred_fallthru
      _
  $region6: #{cdca_forward_pallas.1} parent=0 // loop_footer
    %s14 = sadd.s32 1, %s10
  $region7: #{cdca_forward_pallas.1} parent=0 // loop_footer_branch
    %9 = sbr.rel target = $region3
  $region8: #{cdca_forward_pallas.1} parent=0 // loop_exit
    _

</llo_original>
